<compile_context>
chip_gen: v7x
topology: tpu7x:2x2x1
jax: 0.10.0
libtpu: 0.0.40
codegen_flags: <defaults>
</compile_context>

<pallas_src>
import functools

import jax
import jax.numpy as jnp
from jax import lax
from jax.experimental import pallas as pl
from jax.experimental.pallas import tpu as pltpu


# ----------------------------- Pallas kernel -------------------------------
def _ode_rk4_kernel(y0_ref, w_ref, b_ref, tg_ref, mask_ref, o_ref, *, num_steps, img_w):
    """Fused RK4 integration of y' = tanh(conv3x3(y) + b + t*tgain), all in VMEM.

    y0_ref:   (C_pad, M_pad)       lane-dense state, M = N*H*W on the lane axis
    w_ref:    (C_pad, 9*C_pad)     conv weights as a matmul matrix (tap-major, ch-minor)
    b_ref:    (C_pad, 1)           bias column
    tg_ref:   (C_pad, M_pad)       per-pixel gain of the folded time channel
    mask_ref: (9*C_pad, M_pad)     boundary-validity mask for the 9 shifted taps
    """
    _, m_pad = y0_ref.shape
    dt = 1.0 / float(num_steps)

    # Static shifts (in flat m = ((n*H + h)*W + w) units) for the 3x3 taps.
    shifts = [(-(dh * img_w + dw)) % m_pad for dh in (-1, 0, 1) for dw in (-1, 0, 1)]

    def odefunc(t, y):
        # Build the 9 shifted views in-kernel (XLU rolls), mask out-of-image taps,
        # and do the whole conv as ONE lane-dense MXU matmul.
        parts = [y if s == 0 else pltpu.roll(y, shift=s, axis=1) for s in shifts]
        stacked = jnp.concatenate(parts, axis=0) * mask_ref[...]      # (9*C_pad, M_pad)
        acc = jnp.dot(w_ref[...], stacked,
                      preferred_element_type=jnp.float32)             # (C_pad, M_pad)
        return jnp.tanh(acc + b_ref[...] + t * tg_ref[...])           # EUP tanh

    def step(i, y):
        t = i.astype(jnp.float32) * dt
        k1 = odefunc(t, y)
        k2 = odefunc(t + 0.5 * dt, y + (0.5 * dt) * k1)
        k3 = odefunc(t + 0.5 * dt, y + (0.5 * dt) * k2)
        k4 = odefunc(t + dt, y + dt * k3)
        return y + (dt / 6.0) * (k1 + 2.0 * (k2 + k3) + k4)

    o_ref[...] = lax.fori_loop(0, num_steps, step, y0_ref[...]).astype(o_ref.dtype)


# ----------------------------- JAX glue (one-time relayout) ------------------
def _build_kernel_inputs(x, w_oihw, b):
    n, c, h, w = x.shape
    assert w_oihw.shape == (c, c + 1, 3, 3)
    dtype = x.dtype
    c_pad = ((c + 7) // 8) * 8                       # sublane-align channels
    m = n * h * w
    m_pad = ((m + 127) // 128) * 128                 # lane-align N*H*W

    # Boundary-validity mask per 3x3 tap over flat m = ((n*H + h)*W + w).
    m_idx = jnp.arange(m)
    hh = (m_idx // w) % h
    ww = m_idx % w
    rows = []
    for dh in (-1, 0, 1):
        for dw in (-1, 0, 1):
            rows.append((hh + dh >= 0) & (hh + dh < h) & (ww + dw >= 0) & (ww + dw < w))
    mask9 = jnp.stack(rows, axis=0).astype(dtype)                           # (9, m)

    # Stacked-patch mask, matching the in-kernel concat order (tap-major, channel-minor).
    big_mask = jnp.zeros((9 * c_pad, m_pad), dtype)
    big_mask = big_mask.at[:, :m].set(jnp.repeat(mask9, c_pad, axis=0))

    # Conv weights over the real C input channels -> (c_pad, 9*c_pad) matmul matrix,
    # column index k = k9*c_pad + ci with k9 = kh*3 + kw.
    w_k = jnp.transpose(w_oihw[:, :c, :, :], (2, 3, 1, 0)).reshape(9, c, c)  # [k9, ci, o]
    w_blocks = jnp.zeros((9, c_pad, c_pad), dtype).at[:, :c, :c].set(
        jnp.transpose(w_k, (0, 2, 1)))                                       # [k9, o, ci]
    w_mat = jnp.transpose(w_blocks, (1, 0, 2)).reshape(c_pad, 9 * c_pad)

    # Fold the t*ones channel into an affine bias: its (zero-padded) conv contribution
    # at each output pixel is  t * (w_t @ mask9)[o, m].
    w_t = w_oihw[:, c, :, :].reshape(c, 9)
    tgain = jnp.zeros((c_pad, m_pad), dtype).at[:c, :m].set(w_t @ mask9)
    b_col = jnp.zeros((c_pad, 1), dtype).at[:c, 0].set(b)

    # Lane-dense state: (c_pad, m_pad) with N*H*W on the lane axis; transpose ONCE.
    y0 = jnp.zeros((c_pad, m_pad), dtype).at[:c, :m].set(
        jnp.transpose(x, (1, 0, 2, 3)).reshape(c, m))
    return y0, w_mat, b_col, tgain, big_mask, c_pad, m_pad


@functools.partial(jax.jit, static_argnames=("num_steps",))
def ode_block_forward(x, w_oihw, b, num_steps=8):
    """ODEBlock.forward: integrate from t=0 to t=1 (fixed-step RK4), return final state."""
    n, c, h, w = x.shape
    y0, w_mat, b_col, tgain, big_mask, c_pad, m_pad = _build_kernel_inputs(x, w_oihw, b)

    y_final = pl.pallas_call(
        functools.partial(_ode_rk4_kernel, num_steps=num_steps, img_w=w),
        out_shape=jax.ShapeDtypeStruct((c_pad, m_pad), x.dtype),
        in_specs=[pl.BlockSpec(memory_space=pltpu.MemorySpace.VMEM)] * 5,
        out_specs=pl.BlockSpec(memory_space=pltpu.MemorySpace.VMEM),
    )(y0, w_mat, b_col, tgain, big_mask)

    m = n * h * w
    return jnp.transpose(y_final[:c, :m].reshape(c, n, h, w), (1, 0, 2, 3))  # back to NCHW


# ----------------------------- reference (pure JAX) --------------------------
def _odefunc_ref(t, x_nchw, w_oihw, b):
    n, c, h, w = x_nchw.shape
    x_nhwc = jnp.transpose(x_nchw, (0, 2, 3, 1))
    t_chan = jnp.full((n, h, w, 1), t, dtype=x_nhwc.dtype)
    x_aug = jnp.concatenate([x_nhwc, t_chan], axis=-1)
    w_hwio = jnp.transpose(w_oihw, (2, 3, 1, 0))
    out = lax.conv_general_dilated(
        x_aug, w_hwio, window_strides=(1, 1), padding="SAME",
        dimension_numbers=("NHWC", "HWIO", "NHWC"))
    out = jnp.tanh(out + b.reshape(1, 1, 1, c))
    return jnp.transpose(out, (0, 3, 1, 2))


@functools.partial(jax.jit, static_argnames=("num_steps",))
def _ode_block_ref(x, w_oihw, b, num_steps=8):
    dt = 1.0 / num_steps
    f = lambda t, y: _odefunc_ref(t, y, w_oihw, b)
    y = x
    for i in range(num_steps):
        t = i * dt
        k1 = f(t, y)
        k2 = f(t + 0.5 * dt, y + 0.5 * dt * k1)
        k3 = f(t + 0.5 * dt, y + 0.5 * dt * k2)
        k4 = f(t + dt, y + dt * k3)
        y = y + (dt / 6.0) * (k1 + 2.0 * k2 + 2.0 * k3 + k4)
    return y


# ----------------------------- main ------------------------------------------
if __name__ == "__main__":
    key = jax.random.PRNGKey(0)
    k_x, k_w, k_b = jax.random.split(key, 3)

    N, C, H, W = 2, 4, 16, 16
    x = jax.random.normal(k_x, (N, C, H, W), dtype=jnp.float32)
    # Conv2d(C+1 -> C, 3x3) parameters, PyTorch OIHW layout, deterministic init.
    w_oihw = 0.1 * jax.random.normal(k_w, (C, C + 1, 3, 3), dtype=jnp.float32)
    b = 0.05 * jax.random.normal(k_b, (C,), dtype=jnp.float32)

    out = jax.block_until_ready(ode_block_forward(x, w_oihw, b, num_steps=8))
    assert out.shape == x.shape and out.dtype == x.dtype

    # Full end-to-end correctness check: fused Pallas RK4 vs pure-JAX conv RK4.
    ref = jax.block_until_ready(_ode_block_ref(x, w_oihw, b, num_steps=8))
    assert jnp.allclose(out, ref, rtol=1e-4, atol=1e-4), float(jnp.max(jnp.abs(out - ref)))

    print("KERNEL_OK")
</pallas_src>

<mosaic_0001>
module attributes {stable_mosaic.version = 11 : i64} {
  func.func @_ode_rk4_kernel(%arg0: memref<8x512xf32, #tpu.memory_space<vmem>>, %arg1: memref<8x72xf32, #tpu.memory_space<vmem>>, %arg2: memref<8x1xf32, #tpu.memory_space<vmem>>, %arg3: memref<8x512xf32, #tpu.memory_space<vmem>>, %arg4: memref<72x512xf32, #tpu.memory_space<vmem>>, %arg5: memref<8x512xf32, #tpu.memory_space<vmem>>) attributes {dimension_semantics = [], scalar_prefetch = 0 : i64, scratch_operands = 0 : i64, tpu.core_type = #tpu.core_type<tc>} {
    %c0 = arith.constant 0 : index
    %c0_0 = arith.constant 0 : index
    %0 = vector.load %arg0[%c0, %c0_0] : memref<8x512xf32, #tpu.memory_space<vmem>>, vector<8x512xf32>
    %c0_i32 = arith.constant 0 : i32
    %c8_i32 = arith.constant 8 : i32
    %1 = arith.addi %c0_i32, %c8_i32 : i32
    %c1_i32 = arith.constant 1 : i32
    %2 = scf.for %arg6 = %c0_i32 to %1 step %c1_i32 iter_args(%arg7 = %0) -> (vector<8x512xf32>)  : i32 {
      %4 = arith.sitofp %arg6 : i32 to f32
      %cst = arith.constant 1.250000e-01 : f32
      %5 = arith.mulf %4, %cst : f32
      %c17_i32 = arith.constant 17 : i32
      %6 = tpu.dynamic_rotate %arg7 by %c17_i32 dim 1 : vector<8x512xf32>, i32 -> vector<8x512xf32>
      %c16_i32 = arith.constant 16 : i32
      %7 = tpu.dynamic_rotate %arg7 by %c16_i32 dim 1 : vector<8x512xf32>, i32 -> vector<8x512xf32>
      %c15_i32 = arith.constant 15 : i32
      %8 = tpu.dynamic_rotate %arg7 by %c15_i32 dim 1 : vector<8x512xf32>, i32 -> vector<8x512xf32>
      %c1_i32_4 = arith.constant 1 : i32
      %9 = tpu.dynamic_rotate %arg7 by %c1_i32_4 dim 1 : vector<8x512xf32>, i32 -> vector<8x512xf32>
      %c511_i32 = arith.constant 511 : i32
      %10 = tpu.dynamic_rotate %arg7 by %c511_i32 dim 1 : vector<8x512xf32>, i32 -> vector<8x512xf32>
      %c497_i32 = arith.constant 497 : i32
      %11 = tpu.dynamic_rotate %arg7 by %c497_i32 dim 1 : vector<8x512xf32>, i32 -> vector<8x512xf32>
      %c496_i32 = arith.constant 496 : i32
      %12 = tpu.dynamic_rotate %arg7 by %c496_i32 dim 1 : vector<8x512xf32>, i32 -> vector<8x512xf32>
      %c495_i32 = arith.constant 495 : i32
      %13 = tpu.dynamic_rotate %arg7 by %c495_i32 dim 1 : vector<8x512xf32>, i32 -> vector<8x512xf32>
      %14 = tpu.concatenate %6, %7, %8, %9, %arg7, %10, %11, %12, %13 in 0 : vector<8x512xf32>, vector<8x512xf32>, vector<8x512xf32>, vector<8x512xf32>, vector<8x512xf32>, vector<8x512xf32>, vector<8x512xf32>, vector<8x512xf32>, vector<8x512xf32> -> vector<72x512xf32>
      %c0_5 = arith.constant 0 : index
      %c0_6 = arith.constant 0 : index
      %15 = vector.load %arg4[%c0_5, %c0_6] : memref<72x512xf32, #tpu.memory_space<vmem>>, vector<72x512xf32>
      %16 = arith.mulf %14, %15 : vector<72x512xf32>
      %c0_7 = arith.constant 0 : index
      %c0_8 = arith.constant 0 : index
      %17 = vector.load %arg1[%c0_7, %c0_8] : memref<8x72xf32, #tpu.memory_space<vmem>>, vector<8x72xf32>
      %cst_9 = arith.constant dense<0.000000e+00> : vector<8x512xf32>
      %18 = tpu.matmul %17, %16, %cst_9 {dimension_numbers = #tpu.dot_dimension_numbers<[1], [0], [0], [1], [0, 0, 1, 1], [], []>} : vector<8x72xf32>, vector<72x512xf32>, vector<8x512xf32> -> vector<8x512xf32>
      %c0_10 = arith.constant 0 : index
      %c0_11 = arith.constant 0 : index
      %19 = vector.load %arg2[%c0_10, %c0_11] : memref<8x1xf32, #tpu.memory_space<vmem>>, vector<8x1xf32>
      %20 = vector.broadcast %19 : vector<8x1xf32> to vector<8x512xf32>
      %21 = arith.addf %18, %20 : vector<8x512xf32>
      %c0_12 = arith.constant 0 : index
      %c0_13 = arith.constant 0 : index
      %22 = vector.load %arg3[%c0_12, %c0_13] : memref<8x512xf32, #tpu.memory_space<vmem>>, vector<8x512xf32>
      %23 = vector.broadcast %5 : f32 to vector<8x512xf32>
      %24 = arith.mulf %23, %22 : vector<8x512xf32>
      %25 = arith.addf %21, %24 : vector<8x512xf32>
      %26 = math.tanh %25 : vector<8x512xf32>
      %cst_14 = arith.constant 6.250000e-02 : f32
      %27 = arith.addf %5, %cst_14 : f32
      %cst_15 = arith.constant 6.250000e-02 : f32
      %28 = vector.broadcast %cst_15 : f32 to vector<8x512xf32>
      %29 = arith.mulf %28, %26 : vector<8x512xf32>
      %30 = arith.addf %arg7, %29 : vector<8x512xf32>
      %c17_i32_16 = arith.constant 17 : i32
      %31 = tpu.dynamic_rotate %30 by %c17_i32_16 dim 1 : vector<8x512xf32>, i32 -> vector<8x512xf32>
      %c16_i32_17 = arith.constant 16 : i32
      %32 = tpu.dynamic_rotate %30 by %c16_i32_17 dim 1 : vector<8x512xf32>, i32 -> vector<8x512xf32>
      %c15_i32_18 = arith.constant 15 : i32
      %33 = tpu.dynamic_rotate %30 by %c15_i32_18 dim 1 : vector<8x512xf32>, i32 -> vector<8x512xf32>
      %c1_i32_19 = arith.constant 1 : i32
      %34 = tpu.dynamic_rotate %30 by %c1_i32_19 dim 1 : vector<8x512xf32>, i32 -> vector<8x512xf32>
      %c511_i32_20 = arith.constant 511 : i32
      %35 = tpu.dynamic_rotate %30 by %c511_i32_20 dim 1 : vector<8x512xf32>, i32 -> vector<8x512xf32>
      %c497_i32_21 = arith.constant 497 : i32
      %36 = tpu.dynamic_rotate %30 by %c497_i32_21 dim 1 : vector<8x512xf32>, i32 -> vector<8x512xf32>
      %c496_i32_22 = arith.constant 496 : i32
      %37 = tpu.dynamic_rotate %30 by %c496_i32_22 dim 1 : vector<8x512xf32>, i32 -> vector<8x512xf32>
      %c495_i32_23 = arith.constant 495 : i32
      %38 = tpu.dynamic_rotate %30 by %c495_i32_23 dim 1 : vector<8x512xf32>, i32 -> vector<8x512xf32>
      %39 = tpu.concatenate %31, %32, %33, %34, %30, %35, %36, %37, %38 in 0 : vector<8x512xf32>, vector<8x512xf32>, vector<8x512xf32>, vector<8x512xf32>, vector<8x512xf32>, vector<8x512xf32>, vector<8x512xf32>, vector<8x512xf32>, vector<8x512xf32> -> vector<72x512xf32>
      %c0_24 = arith.constant 0 : index
      %c0_25 = arith.constant 0 : index
      %40 = vector.load %arg4[%c0_24, %c0_25] : memref<72x512xf32, #tpu.memory_space<vmem>>, vector<72x512xf32>
      %41 = arith.mulf %39, %40 : vector<72x512xf32>
      %c0_26 = arith.constant 0 : index
      %c0_27 = arith.constant 0 : index
      %42 = vector.load %arg1[%c0_26, %c0_27] : memref<8x72xf32, #tpu.memory_space<vmem>>, vector<8x72xf32>
      %cst_28 = arith.constant dense<0.000000e+00> : vector<8x512xf32>
      %43 = tpu.matmul %42, %41, %cst_28 {dimension_numbers = #tpu.dot_dimension_numbers<[1], [0], [0], [1], [0, 0, 1, 1], [], []>} : vector<8x72xf32>, vector<72x512xf32>, vector<8x512xf32> -> vector<8x512xf32>
      %c0_29 = arith.constant 0 : index
      %c0_30 = arith.constant 0 : index
      %44 = vector.load %arg2[%c0_29, %c0_30] : memref<8x1xf32, #tpu.memory_space<vmem>>, vector<8x1xf32>
      %45 = vector.broadcast %44 : vector<8x1xf32> to vector<8x512xf32>
      %46 = arith.addf %43, %45 : vector<8x512xf32>
      %c0_31 = arith.constant 0 : index
      %c0_32 = arith.constant 0 : index
      %47 = vector.load %arg3[%c0_31, %c0_32] : memref<8x512xf32, #tpu.memory_space<vmem>>, vector<8x512xf32>
      %48 = vector.broadcast %27 : f32 to vector<8x512xf32>
      %49 = arith.mulf %48, %47 : vector<8x512xf32>
      %50 = arith.addf %46, %49 : vector<8x512xf32>
      %51 = math.tanh %50 : vector<8x512xf32>
      %cst_33 = arith.constant 6.250000e-02 : f32
      %52 = arith.addf %5, %cst_33 : f32
      %cst_34 = arith.constant 6.250000e-02 : f32
      %53 = vector.broadcast %cst_34 : f32 to vector<8x512xf32>
      %54 = arith.mulf %53, %51 : vector<8x512xf32>
      %55 = arith.addf %arg7, %54 : vector<8x512xf32>
      %c17_i32_35 = arith.constant 17 : i32
      %56 = tpu.dynamic_rotate %55 by %c17_i32_35 dim 1 : vector<8x512xf32>, i32 -> vector<8x512xf32>
      %c16_i32_36 = arith.constant 16 : i32
      %57 = tpu.dynamic_rotate %55 by %c16_i32_36 dim 1 : vector<8x512xf32>, i32 -> vector<8x512xf32>
      %c15_i32_37 = arith.constant 15 : i32
      %58 = tpu.dynamic_rotate %55 by %c15_i32_37 dim 1 : vector<8x512xf32>, i32 -> vector<8x512xf32>
      %c1_i32_38 = arith.constant 1 : i32
      %59 = tpu.dynamic_rotate %55 by %c1_i32_38 dim 1 : vector<8x512xf32>, i32 -> vector<8x512xf32>
      %c511_i32_39 = arith.constant 511 : i32
      %60 = tpu.dynamic_rotate %55 by %c511_i32_39 dim 1 : vector<8x512xf32>, i32 -> vector<8x512xf32>
      %c497_i32_40 = arith.constant 497 : i32
      %61 = tpu.dynamic_rotate %55 by %c497_i32_40 dim 1 : vector<8x512xf32>, i32 -> vector<8x512xf32>
      %c496_i32_41 = arith.constant 496 : i32
      %62 = tpu.dynamic_rotate %55 by %c496_i32_41 dim 1 : vector<8x512xf32>, i32 -> vector<8x512xf32>
      %c495_i32_42 = arith.constant 495 : i32
      %63 = tpu.dynamic_rotate %55 by %c495_i32_42 dim 1 : vector<8x512xf32>, i32 -> vector<8x512xf32>
      %64 = tpu.concatenate %56, %57, %58, %59, %55, %60, %61, %62, %63 in 0 : vector<8x512xf32>, vector<8x512xf32>, vector<8x512xf32>, vector<8x512xf32>, vector<8x512xf32>, vector<8x512xf32>, vector<8x512xf32>, vector<8x512xf32>, vector<8x512xf32> -> vector<72x512xf32>
      %c0_43 = arith.constant 0 : index
      %c0_44 = arith.constant 0 : index
      %65 = vector.load %arg4[%c0_43, %c0_44] : memref<72x512xf32, #tpu.memory_space<vmem>>, vector<72x512xf32>
      %66 = arith.mulf %64, %65 : vector<72x512xf32>
      %c0_45 = arith.constant 0 : index
      %c0_46 = arith.constant 0 : index
      %67 = vector.load %arg1[%c0_45, %c0_46] : memref<8x72xf32, #tpu.memory_space<vmem>>, vector<8x72xf32>
      %cst_47 = arith.constant dense<0.000000e+00> : vector<8x512xf32>
      %68 = tpu.matmul %67, %66, %cst_47 {dimension_numbers = #tpu.dot_dimension_numbers<[1], [0], [0], [1], [0, 0, 1, 1], [], []>} : vector<8x72xf32>, vector<72x512xf32>, vector<8x512xf32> -> vector<8x512xf32>
      %c0_48 = arith.constant 0 : index
      %c0_49 = arith.constant 0 : index
      %69 = vector.load %arg2[%c0_48, %c0_49] : memref<8x1xf32, #tpu.memory_space<vmem>>, vector<8x1xf32>
      %70 = vector.broadcast %69 : vector<8x1xf32> to vector<8x512xf32>
      %71 = arith.addf %68, %70 : vector<8x512xf32>
      %c0_50 = arith.constant 0 : index
      %c0_51 = arith.constant 0 : index
      %72 = vector.load %arg3[%c0_50, %c0_51] : memref<8x512xf32, #tpu.memory_space<vmem>>, vector<8x512xf32>
      %73 = vector.broadcast %52 : f32 to vector<8x512xf32>
      %74 = arith.mulf %73, %72 : vector<8x512xf32>
      %75 = arith.addf %71, %74 : vector<8x512xf32>
      %76 = math.tanh %75 : vector<8x512xf32>
      %cst_52 = arith.constant 1.250000e-01 : f32
      %77 = arith.addf %5, %cst_52 : f32
      %cst_53 = arith.constant 1.250000e-01 : f32
      %78 = vector.broadcast %cst_53 : f32 to vector<8x512xf32>
      %79 = arith.mulf %78, %76 : vector<8x512xf32>
      %80 = arith.addf %arg7, %79 : vector<8x512xf32>
      %c17_i32_54 = arith.constant 17 : i32
      %81 = tpu.dynamic_rotate %80 by %c17_i32_54 dim 1 : vector<8x512xf32>, i32 -> vector<8x512xf32>
      %c16_i32_55 = arith.constant 16 : i32
      %82 = tpu.dynamic_rotate %80 by %c16_i32_55 dim 1 : vector<8x512xf32>, i32 -> vector<8x512xf32>
      %c15_i32_56 = arith.constant 15 : i32
      %83 = tpu.dynamic_rotate %80 by %c15_i32_56 dim 1 : vector<8x512xf32>, i32 -> vector<8x512xf32>
      %c1_i32_57 = arith.constant 1 : i32
      %84 = tpu.dynamic_rotate %80 by %c1_i32_57 dim 1 : vector<8x512xf32>, i32 -> vector<8x512xf32>
      %c511_i32_58 = arith.constant 511 : i32
      %85 = tpu.dynamic_rotate %80 by %c511_i32_58 dim 1 : vector<8x512xf32>, i32 -> vector<8x512xf32>
      %c497_i32_59 = arith.constant 497 : i32
      %86 = tpu.dynamic_rotate %80 by %c497_i32_59 dim 1 : vector<8x512xf32>, i32 -> vector<8x512xf32>
      %c496_i32_60 = arith.constant 496 : i32
      %87 = tpu.dynamic_rotate %80 by %c496_i32_60 dim 1 : vector<8x512xf32>, i32 -> vector<8x512xf32>
      %c495_i32_61 = arith.constant 495 : i32
      %88 = tpu.dynamic_rotate %80 by %c495_i32_61 dim 1 : vector<8x512xf32>, i32 -> vector<8x512xf32>
      %89 = tpu.concatenate %81, %82, %83, %84, %80, %85, %86, %87, %88 in 0 : vector<8x512xf32>, vector<8x512xf32>, vector<8x512xf32>, vector<8x512xf32>, vector<8x512xf32>, vector<8x512xf32>, vector<8x512xf32>, vector<8x512xf32>, vector<8x512xf32> -> vector<72x512xf32>
      %c0_62 = arith.constant 0 : index
      %c0_63 = arith.constant 0 : index
      %90 = vector.load %arg4[%c0_62, %c0_63] : memref<72x512xf32, #tpu.memory_space<vmem>>, vector<72x512xf32>
      %91 = arith.mulf %89, %90 : vector<72x512xf32>
      %c0_64 = arith.constant 0 : index
      %c0_65 = arith.constant 0 : index
      %92 = vector.load %arg1[%c0_64, %c0_65] : memref<8x72xf32, #tpu.memory_space<vmem>>, vector<8x72xf32>
      %cst_66 = arith.constant dense<0.000000e+00> : vector<8x512xf32>
      %93 = tpu.matmul %92, %91, %cst_66 {dimension_numbers = #tpu.dot_dimension_numbers<[1], [0], [0], [1], [0, 0, 1, 1], [], []>} : vector<8x72xf32>, vector<72x512xf32>, vector<8x512xf32> -> vector<8x512xf32>
      %c0_67 = arith.constant 0 : index
      %c0_68 = arith.constant 0 : index
      %94 = vector.load %arg2[%c0_67, %c0_68] : memref<8x1xf32, #tpu.memory_space<vmem>>, vector<8x1xf32>
      %95 = vector.broadcast %94 : vector<8x1xf32> to vector<8x512xf32>
      %96 = arith.addf %93, %95 : vector<8x512xf32>
      %c0_69 = arith.constant 0 : index
      %c0_70 = arith.constant 0 : index
      %97 = vector.load %arg3[%c0_69, %c0_70] : memref<8x512xf32, #tpu.memory_space<vmem>>, vector<8x512xf32>
      %98 = vector.broadcast %77 : f32 to vector<8x512xf32>
      %99 = arith.mulf %98, %97 : vector<8x512xf32>
      %100 = arith.addf %96, %99 : vector<8x512xf32>
      %101 = math.tanh %100 : vector<8x512xf32>
      %102 = arith.addf %51, %76 : vector<8x512xf32>
      %cst_71 = arith.constant 2.000000e+00 : f32
      %103 = vector.broadcast %cst_71 : f32 to vector<8x512xf32>
      %104 = arith.mulf %103, %102 : vector<8x512xf32>
      %105 = arith.addf %26, %104 : vector<8x512xf32>
      %106 = arith.addf %105, %101 : vector<8x512xf32>
      %cst_72 = arith.constant 0.020833334 : f32
      %107 = vector.broadcast %cst_72 : f32 to vector<8x512xf32>
      %108 = arith.mulf %107, %106 : vector<8x512xf32>
      %109 = arith.addf %arg7, %108 : vector<8x512xf32>
      scf.yield %109 : vector<8x512xf32>
    }
    %c8_i32_1 = arith.constant 8 : i32
    %c0_2 = arith.constant 0 : index
    %c0_3 = arith.constant 0 : index
    %3 = vector.load %arg5[%c0_2, %c0_3] : memref<8x512xf32, #tpu.memory_space<vmem>>, vector<8x512xf32>
    tpu.vector_store %arg5[%c0_2, %c0_3], %2 {strides = array<i32>} : memref<8x512xf32, #tpu.memory_space<vmem>>, vector<8x512xf32>,
    return
  }
}

</mosaic_0001>

<llo_original>
// kernel: ode_block_forward.1
$region0: #{ode_block_forward.1}
  #allocation0 [shape = 'u32[]', space=smem, size = 0x4, offset = 0x4, fixed_abs, tag = 'smem constant byte address 0x4 - core index']
  #allocation1 [shape = 'u32[144,128]{1,0:T(1,128)}', space=vmem, size = 0x12000, scoped, tag = 'internal scratch']
  %s0 = inlined_call_operand.vmem [shape: f32[8,512], index: 0, kind: input, shape index: {}]
  %s1 = inlined_call_operand.vmem [shape: f32[8,72], index: 1, kind: input, shape index: {}]
  %s2 = inlined_call_operand.vmem [shape: f32[8,1], index: 2, kind: input, shape index: {}]
  %s3 = inlined_call_operand.vmem [shape: f32[8,512], index: 3, kind: input, shape index: {}]
  %s4 = inlined_call_operand.vmem [shape: f32[72,512], index: 4, kind: input, shape index: {}]
  %s5 = inlined_call_operand.vmem [shape: f32[8,512], index: 5, kind: output, shape index: {}]
  %s6 = sld [smem:[#allocation0]]
  $region37: #{ode_block_forward.1} parent=0
    _
  %s8 = ssub.s32 1, %s6
  %s9 = scalar_select 0, %s8, %s6
  // Predicated region
  $region2: #{ode_block_forward.1} parent=0 // pred_check
    _
  $region3: #{ode_block_forward.1} parent=0 // pred_check_branch
    %11 = sbr.rel (0) target = $region5
  $region4: #{ode_block_forward.1} parent=0 // pred_region
    _
  $region5: #{ode_block_forward.1} parent=0 // pred_fallthru
    _
  // Predicated region
  $region6: #{ode_block_forward.1} parent=0 // pred_check
    _
  $region7: #{ode_block_forward.1} parent=0 // pred_check_branch
    %13 = sbr.rel (0) target = $region9
  $region8: #{ode_block_forward.1} parent=0 // pred_region
    _
  $region9: #{ode_block_forward.1} parent=0 // pred_fallthru
    _
  // Predicated region
  $region10: #{ode_block_forward.1} parent=0 // pred_check
    _
  $region11: #{ode_block_forward.1} parent=0 // pred_check_branch
    %15 = sbr.rel (0) target = $region13
  $region12: #{ode_block_forward.1} parent=0 // pred_region
    _
  $region13: #{ode_block_forward.1} parent=0 // pred_fallthru
    _
  // Predicated region
  $region14: #{ode_block_forward.1} parent=0 // pred_check
    _
  $region15: #{ode_block_forward.1} parent=0 // pred_check_branch
    %17 = sbr.rel (0) target = $region17
  $region16: #{ode_block_forward.1} parent=0 // pred_region
    _
  $region17: #{ode_block_forward.1} parent=0 // pred_fallthru
    _
  // Predicated region
  $region18: #{ode_block_forward.1} parent=0 // pred_check
    _
  $region19: #{ode_block_forward.1} parent=0 // pred_check_branch
    %19 = sbr.rel (0) target = $region21
  $region20: #{ode_block_forward.1} parent=0 // pred_region
    _
  $region21: #{ode_block_forward.1} parent=0 // pred_fallthru
    _
  %v20 = vld [vmem:[%s0] sm:$0xff]
  %v21 = vld [vmem:[%s0 + $0x8] sm:$0xff]
  %v22 = vld [vmem:[%s0 + $0x10] sm:$0xff]
  %v23 = vld [vmem:[%s0 + $0x18] sm:$0xff]
  loop: start=0, step=1, limit=8
  $region22: #{ode_block_forward.1} parent=0 // loop_pre_header
    _
  $region23: #{ode_block_forward.1} parent=0 // loop_header
    %s25 = sphi 0, %s29
    %p26 = scmp.ge.s32.totalorder %s25, 8
    %v30 = vphi %v20, %v1286
    %v31 = vphi %v21, %v1287
    %v32 = vphi %v22, %v1288
    %v33 = vphi %v23, %v1289
  $region24: #{ode_block_forward.1} parent=0 // loop_header_branch
    %28 = sbr.rel (%p26) target = $region28
  $region25: #{ode_block_forward.1} parent=0 // loop_body
    %s34 = scvt.s32.f32 %s25
    %s35 = smul.f32 %s34, 0.125
    %36 = vrot.lane.b32.xlu0 %v30, 17
    %v37 = vpop.permute.xlu0 %36
    %38 = vrot.lane.b32.xlu0 %v31, 17
    %v39 = vpop.permute.xlu0 %38
    %40 = vrot.lane.b32.xlu0 %v32, 17
    %v41 = vpop.permute.xlu0 %40
    %42 = vrot.lane.b32.xlu0 %v33, 17
    %v43 = vpop.permute.xlu0 %42
    %v44 = vlaneseq
    %v45 = vand.u32 %v44, 127
    %vm46 = vcmp.lt.s32.totalorder %v45, 17
    %v47 = vsel %vm46, %v41, %v43
    %v48 = vsel %vm46, %v39, %v41
    %v49 = vsel %vm46, %v37, %v39
    %v50 = vsel %vm46, %v43, %v37
    %51 = vrot.lane.b32.xlu0 %v30, 16
    %v52 = vpop.permute.xlu0 %51
    %53 = vrot.lane.b32.xlu0 %v31, 16
    %v54 = vpop.permute.xlu0 %53
    %55 = vrot.lane.b32.xlu0 %v32, 16
    %v56 = vpop.permute.xlu0 %55
    %57 = vrot.lane.b32.xlu0 %v33, 16
    %v58 = vpop.permute.xlu0 %57
    %vm59 = vcmp.lt.s32.totalorder %v45, 16
    %v60 = vsel %vm59, %v56, %v58
    %v61 = vsel %vm59, %v54, %v56
    %v62 = vsel %vm59, %v52, %v54
    %v63 = vsel %vm59, %v58, %v52
    %64 = vrot.lane.b32.xlu0 %v30, 15
    %v65 = vpop.permute.xlu0 %64
    %66 = vrot.lane.b32.xlu0 %v31, 15
    %v67 = vpop.permute.xlu0 %66
    %68 = vrot.lane.b32.xlu0 %v32, 15
    %v69 = vpop.permute.xlu0 %68
    %70 = vrot.lane.b32.xlu0 %v33, 15
    %v71 = vpop.permute.xlu0 %70
    %vm72 = vcmp.lt.s32.totalorder %v45, 15
    %v73 = vsel %vm72, %v69, %v71
    %v74 = vsel %vm72, %v67, %v69
    %v75 = vsel %vm72, %v65, %v67
    %v76 = vsel %vm72, %v71, %v65
    %77 = vrot.lane.b32.xlu0 %v30, 1
    %v78 = vpop.permute.xlu0 %77
    %79 = vrot.lane.b32.xlu0 %v31, 1
    %v80 = vpop.permute.xlu0 %79
    %81 = vrot.lane.b32.xlu0 %v32, 1
    %v82 = vpop.permute.xlu0 %81
    %83 = vrot.lane.b32.xlu0 %v33, 1
    %v84 = vpop.permute.xlu0 %83
    %vm85 = vcmp.lt.s32.totalorder %v45, 1
    %v86 = vsel %vm85, %v82, %v84
    %v87 = vsel %vm85, %v80, %v82
    %v88 = vsel %vm85, %v78, %v80
    %v89 = vsel %vm85, %v84, %v78
    %90 = vrot.lane.b32.xlu0 %v30, 127
    %v91 = vpop.permute.xlu0 %90
    %92 = vrot.lane.b32.xlu0 %v31, 127
    %v93 = vpop.permute.xlu0 %92
    %94 = vrot.lane.b32.xlu0 %v32, 127
    %v95 = vpop.permute.xlu0 %94
    %96 = vrot.lane.b32.xlu0 %v33, 127
    %v97 = vpop.permute.xlu0 %96
    %vm98 = vcmp.lt.s32.totalorder %v45, 127
    %v99 = vsel %vm98, %v95, %v97
    %v100 = vsel %vm98, %v93, %v95
    %v101 = vsel %vm98, %v91, %v93
    %v102 = vsel %vm98, %v97, %v91
    %103 = vrot.lane.b32.xlu0 %v30, 113
    %v104 = vpop.permute.xlu0 %103
    %105 = vrot.lane.b32.xlu0 %v31, 113
    %v106 = vpop.permute.xlu0 %105
    %107 = vrot.lane.b32.xlu0 %v32, 113
    %v108 = vpop.permute.xlu0 %107
    %109 = vrot.lane.b32.xlu0 %v33, 113
    %v110 = vpop.permute.xlu0 %109
    %vm111 = vcmp.lt.s32.totalorder %v45, 113
    %v112 = vsel %vm111, %v108, %v110
    %v113 = vsel %vm111, %v106, %v108
    %v114 = vsel %vm111, %v104, %v106
    %v115 = vsel %vm111, %v110, %v104
    %116 = vrot.lane.b32.xlu0 %v30, 112
    %v117 = vpop.permute.xlu0 %116
    %118 = vrot.lane.b32.xlu0 %v31, 112
    %v119 = vpop.permute.xlu0 %118
    %120 = vrot.lane.b32.xlu0 %v32, 112
    %v121 = vpop.permute.xlu0 %120
    %122 = vrot.lane.b32.xlu0 %v33, 112
    %v123 = vpop.permute.xlu0 %122
    %vm124 = vcmp.lt.s32.totalorder %v45, 112
    %v125 = vsel %vm124, %v121, %v123
    %v126 = vsel %vm124, %v119, %v121
    %v127 = vsel %vm124, %v117, %v119
    %v128 = vsel %vm124, %v123, %v117
    %129 = vrot.lane.b32.xlu0 %v30, 111
    %v130 = vpop.permute.xlu0 %129
    %131 = vrot.lane.b32.xlu0 %v31, 111
    %v132 = vpop.permute.xlu0 %131
    %133 = vrot.lane.b32.xlu0 %v32, 111
    %v134 = vpop.permute.xlu0 %133
    %135 = vrot.lane.b32.xlu0 %v33, 111
    %v136 = vpop.permute.xlu0 %135
    %vm137 = vcmp.lt.s32.totalorder %v45, 111
    %v138 = vsel %vm137, %v134, %v136
    %v139 = vsel %vm137, %v132, %v134
    %v140 = vsel %vm137, %v130, %v132
    %v141 = vsel %vm137, %v136, %v130
    %v142 = vld [vmem:[%s4] sm:$0xff]
    %v143 = vld [vmem:[%s4 + $0x8] sm:$0xff]
    %v144 = vld [vmem:[%s4 + $0x10] sm:$0xff]
    %v145 = vld [vmem:[%s4 + $0x18] sm:$0xff]
    %v146 = vld [vmem:[%s4 + $0x20] sm:$0xff]
    %v147 = vld [vmem:[%s4 + $0x28] sm:$0xff]
    %v148 = vld [vmem:[%s4 + $0x30] sm:$0xff]
    %v149 = vld [vmem:[%s4 + $0x38] sm:$0xff]
    %v150 = vld [vmem:[%s4 + $0x40] sm:$0xff]
    %v151 = vld [vmem:[%s4 + $0x48] sm:$0xff]
    %v152 = vld [vmem:[%s4 + $0x50] sm:$0xff]
    %v153 = vld [vmem:[%s4 + $0x58] sm:$0xff]
    %v154 = vld [vmem:[%s4 + $0x60] sm:$0xff]
    %v155 = vld [vmem:[%s4 + $0x68] sm:$0xff]
    %v156 = vld [vmem:[%s4 + $0x70] sm:$0xff]
    %v157 = vld [vmem:[%s4 + $0x78] sm:$0xff]
    %v158 = vld [vmem:[%s4 + $0x80] sm:$0xff]
    %v159 = vld [vmem:[%s4 + $0x88] sm:$0xff]
    %v160 = vld [vmem:[%s4 + $0x90] sm:$0xff]
    %v161 = vld [vmem:[%s4 + $0x98] sm:$0xff]
    %v162 = vld [vmem:[%s4 + $0xa0] sm:$0xff]
    %v163 = vld [vmem:[%s4 + $0xa8] sm:$0xff]
    %v164 = vld [vmem:[%s4 + $0xb0] sm:$0xff]
    %v165 = vld [vmem:[%s4 + $0xb8] sm:$0xff]
    %v166 = vld [vmem:[%s4 + $0xc0] sm:$0xff]
    %v167 = vld [vmem:[%s4 + $0xc8] sm:$0xff]
    %v168 = vld [vmem:[%s4 + $0xd0] sm:$0xff]
    %v169 = vld [vmem:[%s4 + $0xd8] sm:$0xff]
    %v170 = vld [vmem:[%s4 + $0xe0] sm:$0xff]
    %v171 = vld [vmem:[%s4 + $0xe8] sm:$0xff]
    %v172 = vld [vmem:[%s4 + $0xf0] sm:$0xff]
    %v173 = vld [vmem:[%s4 + $0xf8] sm:$0xff]
    %v174 = vld [vmem:[%s4 + $0x100] sm:$0xff]
    %v175 = vld [vmem:[%s4 + $0x108] sm:$0xff]
    %v176 = vld [vmem:[%s4 + $0x110] sm:$0xff]
    %v177 = vld [vmem:[%s4 + $0x118] sm:$0xff]
    %v178 = vmul.f32 %v50, %v142
    %v179 = vmul.f32 %v49, %v143
    %v180 = vmul.f32 %v48, %v144
    %v181 = vmul.f32 %v47, %v145
    %v182 = vmul.f32 %v63, %v146
    %v183 = vmul.f32 %v62, %v147
    %v184 = vmul.f32 %v61, %v148
    %v185 = vmul.f32 %v60, %v149
    %v186 = vmul.f32 %v76, %v150
    %v187 = vmul.f32 %v75, %v151
    %v188 = vmul.f32 %v74, %v152
    %v189 = vmul.f32 %v73, %v153
    %v190 = vmul.f32 %v89, %v154
    %v191 = vmul.f32 %v88, %v155
    %v192 = vmul.f32 %v87, %v156
    %v193 = vmul.f32 %v86, %v157
    %v194 = vmul.f32 %v30, %v158
    %v195 = vmul.f32 %v31, %v159
    %v196 = vmul.f32 %v32, %v160
    %v197 = vmul.f32 %v33, %v161
    %v198 = vmul.f32 %v101, %v162
    %v199 = vmul.f32 %v100, %v163
    %v200 = vmul.f32 %v99, %v164
    %v201 = vmul.f32 %v102, %v165
    %v202 = vmul.f32 %v114, %v166
    %v203 = vmul.f32 %v113, %v167
    %v204 = vmul.f32 %v112, %v168
    %v205 = vmul.f32 %v115, %v169
    %v206 = vmul.f32 %v127, %v170
    %v207 = vmul.f32 %v126, %v171
    %v208 = vmul.f32 %v125, %v172
    %v209 = vmul.f32 %v128, %v173
    %v210 = vmul.f32 %v140, %v174
    %v211 = vmul.f32 %v139, %v175
    %v212 = vmul.f32 %v138, %v176
    %v213 = vmul.f32 %v141, %v177
    %v214 = vld [vmem:[%s1] sm:$0xff]
    %v215 = vld [vmem:[%s2] sm:$0xff]
    %217 = vset.pattern.permute.xlu0 0
    %218 = vperm.xlu0 %217, %v215
    %v219 = vpop.permute.xlu0 %218
    %vm221 = vcmask 588800
    %v223 = vsel %vm221, %v214, 0
    %225 = vmatprep.subr.mxu0 %v179
    %226 = vmatpush1.msra.mxu0 %v178
    %227 = vmatprep.subr.mxu0 %v183
    %228 = vmatpush1.msra.mxu0 %v182
    %229 = vmatprep.subr.mxu0 %v187
    %230 = vmatpush1.msra.mxu0 %v186
    %231 = vmatprep.subr.mxu0 %v191
    %232 = vmatpush1.msra.mxu0 %v190
    %233 = vmatprep.subr.mxu0 %v195
    %234 = vmatpush1.msra.mxu0 %v194
    %235 = vmatprep.subr.mxu0 %v199
    %236 = vmatpush1.msra.mxu0 %v198
    %237 = vmatprep.subr.mxu0 %v203
    %238 = vmatpush1.msra.mxu0 %v202
    %239 = vmatprep.subr.mxu0 %v207
    %240 = vmatpush1.msra.mxu0 %v206
    %241 = vmatprep.subr.mxu0 %v211
    %242 = vmatpush1.msra.mxu0 %v210
    %243 = vmatprep.subr.mxu0 0.0
    %244 = vmatpush1.msra.mxu0 0.0
    %245 = vmatprep.subr.mxu0 0.0
    %246 = vmatpush1.msra.mxu0 0.0
    %247 = vmatprep.subr.mxu0 0.0
    %248 = vmatpush1.msra.mxu0 0.0
    %249 = vmatprep.subr.mxu0 0.0
    %250 = vmatpush1.msra.mxu0 0.0
    %251 = vmatprep.subr.mxu0 0.0
    %252 = vmatpush1.msra.mxu0 0.0
    %253 = vmatprep.subr.mxu0 0.0
    %254 = vmatpush1.msra.mxu0 0.0
    %255 = vmatprep.subr.mxu0 0.0
    %256 = vmatpush1.msra.mxu0 0.0
    %257 = vmatprep.subr.mxu0 0.0
    %258 = vmatpush1.msra.mxu0 0.0
    %259 = vmatprep.subr.mxu0 0.0
    %260 = vmatpush1.msra.mxu0 0.0
    %261 = vmatprep.subr.mxu0 0.0
    %262 = vmatpush1.msra.mxu0 0.0
    %263 = vmatprep.subr.mxu0 0.0
    %264 = vmatpush1.msra.mxu0 0.0
    %265 = vmatprep.subr.mxu0 0.0
    %266 = vmatpush1.msra.mxu0 0.0
    %267 = vmatprep.subr.mxu0 0.0
    %268 = vmatpush1.msra.mxu0 0.0
    %269 = vmatprep.subr.mxu0 0.0
    %270 = vmatpush1.msra.mxu0 0.0
    %271 = vmatprep.subr.mxu0 0.0
    %272 = vmatpush1.msra.mxu0 0.0
    %273 = vmatprep.subr.mxu0 0.0
    %274 = vmatpush1.msra.mxu0 0.0
    %275 = vmatprep.subr.mxu0 0.0
    %276 = vmatpush1.msra.mxu0 0.0
    %277 = vmatprep.subr.mxu0 0.0
    %278 = vmatpush1.msra.mxu0 0.0
    %279 = vmatprep.subr.mxu0 0.0
    %280 = vmatpush1.msra.mxu0 0.0
    %281 = vmatprep.subr.mxu0 0.0
    %282 = vmatpush1.msra.mxu0 0.0
    %283 = vmatprep.subr.mxu0 0.0
    %284 = vmatpush1.msra.mxu0 0.0
    %285 = vmatprep.subr.mxu0 0.0
    %286 = vmatpush1.msra.mxu0 0.0
    %287 = vmatprep.subr.mxu0 0.0
    %288 = vmatpush1.msra.mxu0 0.0
    %289 = vmatprep.mubr.f32.mxu0 0.0
    %290 = vmatmul.mubr.f32.gmra.mrb[0].mxu0 %v223
    %v291 = vpop.f32.mrb[0].mxu0
    %v292 = vadd.f32 %v219, %v291
    %v293 = vpop.f32.mrb[0].mxu0
    %v294 = vadd.f32 %v219, %v293
    %295 = vdwg.mxu0
    %296 = vmatprep.subr.mxu0 %v181
    %297 = vmatpush1.msra.mxu0 %v180
    %298 = vmatprep.subr.mxu0 %v185
    %299 = vmatpush1.msra.mxu0 %v184
    %300 = vmatprep.subr.mxu0 %v189
    %301 = vmatpush1.msra.mxu0 %v188
    %302 = vmatprep.subr.mxu0 %v193
    %303 = vmatpush1.msra.mxu0 %v192
    %304 = vmatprep.subr.mxu0 %v197
    %305 = vmatpush1.msra.mxu0 %v196
    %306 = vmatprep.subr.mxu0 %v201
    %307 = vmatpush1.msra.mxu0 %v200
    %308 = vmatprep.subr.mxu0 %v205
    %309 = vmatpush1.msra.mxu0 %v204
    %310 = vmatprep.subr.mxu0 %v209
    %311 = vmatpush1.msra.mxu0 %v208
    %312 = vmatprep.subr.mxu0 %v213
    %313 = vmatpush1.msra.mxu0 %v212
    %314 = vmatprep.subr.mxu0 0.0
    %315 = vmatpush1.msra.mxu0 0.0
    %316 = vmatprep.subr.mxu0 0.0
    %317 = vmatpush1.msra.mxu0 0.0
    %318 = vmatprep.subr.mxu0 0.0
    %319 = vmatpush1.msra.mxu0 0.0
    %320 = vmatprep.subr.mxu0 0.0
    %321 = vmatpush1.msra.mxu0 0.0
    %322 = vmatprep.subr.mxu0 0.0
    %323 = vmatpush1.msra.mxu0 0.0
    %324 = vmatprep.subr.mxu0 0.0
    %325 = vmatpush1.msra.mxu0 0.0
    %326 = vmatprep.subr.mxu0 0.0
    %327 = vmatpush1.msra.mxu0 0.0
    %328 = vmatprep.subr.mxu0 0.0
    %329 = vmatpush1.msra.mxu0 0.0
    %330 = vmatprep.subr.mxu0 0.0
    %331 = vmatpush1.msra.mxu0 0.0
    %332 = vmatprep.subr.mxu0 0.0
    %333 = vmatpush1.msra.mxu0 0.0
    %334 = vmatprep.subr.mxu0 0.0
    %335 = vmatpush1.msra.mxu0 0.0
    %336 = vmatprep.subr.mxu0 0.0
    %337 = vmatpush1.msra.mxu0 0.0
    %338 = vmatprep.subr.mxu0 0.0
    %339 = vmatpush1.msra.mxu0 0.0
    %340 = vmatprep.subr.mxu0 0.0
    %341 = vmatpush1.msra.mxu0 0.0
    %342 = vmatprep.subr.mxu0 0.0
    %343 = vmatpush1.msra.mxu0 0.0
    %344 = vmatprep.subr.mxu0 0.0
    %345 = vmatpush1.msra.mxu0 0.0
    %346 = vmatprep.subr.mxu0 0.0
    %347 = vmatpush1.msra.mxu0 0.0
    %348 = vmatprep.subr.mxu0 0.0
    %349 = vmatpush1.msra.mxu0 0.0
    %350 = vmatprep.subr.mxu0 0.0
    %351 = vmatpush1.msra.mxu0 0.0
    %352 = vmatprep.subr.mxu0 0.0
    %353 = vmatpush1.msra.mxu0 0.0
    %354 = vmatprep.subr.mxu0 0.0
    %355 = vmatpush1.msra.mxu0 0.0
    %356 = vmatprep.subr.mxu0 0.0
    %357 = vmatpush1.msra.mxu0 0.0
    %358 = vmatprep.subr.mxu0 0.0
    %359 = vmatpush1.msra.mxu0 0.0
    %360 = vmatprep.mubr.f32.mxu0 0.0
    %361 = vmatmul.mubr.f32.gmra.mrb[0].mxu0 %v223
    %v362 = vpop.f32.mrb[0].mxu0
    %v363 = vadd.f32 %v219, %v362
    %v364 = vpop.f32.mrb[0].mxu0
    %v365 = vadd.f32 %v219, %v364
    %366 = vdwg.mxu0
    %v367 = vld [vmem:[%s3] sm:$0xff]
    %v368 = vld [vmem:[%s3 + $0x8] sm:$0xff]
    %v369 = vld [vmem:[%s3 + $0x10] sm:$0xff]
    %v370 = vld [vmem:[%s3 + $0x18] sm:$0xff]
    %v371 = vstv %s35
    %v372 = vmul.f32 %v371, %v367
    %v373 = vmul.f32 %v371, %v368
    %v374 = vmul.f32 %v371, %v369
    %v375 = vmul.f32 %v371, %v370
    %v376 = vadd.f32 %v292, %v372
    %v377 = vadd.f32 %v294, %v373
    %v378 = vadd.f32 %v363, %v374
    %v379 = vadd.f32 %v365, %v375
    %v380 = vtanh.pop %v376
    %v381 = vtanh.pop %v377
    %v382 = vtanh.pop %v378
    %v383 = vtanh.pop %v379
    %s384 = sadd.f32 %s35, 0.0625
    %v385 = vmul.f32 %v380, 0.0625
    %v386 = vmul.f32 %v381, 0.0625
    %v387 = vmul.f32 %v382, 0.0625
    %v388 = vmul.f32 %v383, 0.0625
    %v389 = vadd.f32 %v30, %v385
    %v390 = vadd.f32 %v31, %v386
    %v391 = vadd.f32 %v32, %v387
    %v392 = vadd.f32 %v33, %v388
    %393 = vrot.lane.b32.xlu0 %v389, 17
    %v394 = vpop.permute.xlu0 %393
    %395 = vrot.lane.b32.xlu0 %v390, 17
    %v396 = vpop.permute.xlu0 %395
    %397 = vrot.lane.b32.xlu0 %v391, 17
    %v398 = vpop.permute.xlu0 %397
    %399 = vrot.lane.b32.xlu0 %v392, 17
    %v400 = vpop.permute.xlu0 %399
    %v401 = vsel %vm46, %v398, %v400
    %v402 = vsel %vm46, %v396, %v398
    %v403 = vsel %vm46, %v394, %v396
    %v404 = vsel %vm46, %v400, %v394
    %405 = vrot.lane.b32.xlu0 %v389, 16
    %v406 = vpop.permute.xlu0 %405
    %407 = vrot.lane.b32.xlu0 %v390, 16
    %v408 = vpop.permute.xlu0 %407
    %409 = vrot.lane.b32.xlu0 %v391, 16
    %v410 = vpop.permute.xlu0 %409
    %411 = vrot.lane.b32.xlu0 %v392, 16
    %v412 = vpop.permute.xlu0 %411
    %v413 = vsel %vm59, %v410, %v412
    %v414 = vsel %vm59, %v408, %v410
    %v415 = vsel %vm59, %v406, %v408
    %v416 = vsel %vm59, %v412, %v406
    %417 = vrot.lane.b32.xlu0 %v389, 15
    %v418 = vpop.permute.xlu0 %417
    %419 = vrot.lane.b32.xlu0 %v390, 15
    %v420 = vpop.permute.xlu0 %419
    %421 = vrot.lane.b32.xlu0 %v391, 15
    %v422 = vpop.permute.xlu0 %421
    %423 = vrot.lane.b32.xlu0 %v392, 15
    %v424 = vpop.permute.xlu0 %423
    %v425 = vsel %vm72, %v422, %v424
    %v426 = vsel %vm72, %v420, %v422
    %v427 = vsel %vm72, %v418, %v420
    %v428 = vsel %vm72, %v424, %v418
    %429 = vrot.lane.b32.xlu0 %v389, 1
    %v430 = vpop.permute.xlu0 %429
    %431 = vrot.lane.b32.xlu0 %v390, 1
    %v432 = vpop.permute.xlu0 %431
    %433 = vrot.lane.b32.xlu0 %v391, 1
    %v434 = vpop.permute.xlu0 %433
    %435 = vrot.lane.b32.xlu0 %v392, 1
    %v436 = vpop.permute.xlu0 %435
    %v437 = vsel %vm85, %v434, %v436
    %v438 = vsel %vm85, %v432, %v434
    %v439 = vsel %vm85, %v430, %v432
    %v440 = vsel %vm85, %v436, %v430
    %441 = vrot.lane.b32.xlu0 %v389, 127
    %v442 = vpop.permute.xlu0 %441
    %443 = vrot.lane.b32.xlu0 %v390, 127
    %v444 = vpop.permute.xlu0 %443
    %445 = vrot.lane.b32.xlu0 %v391, 127
    %v446 = vpop.permute.xlu0 %445
    %447 = vrot.lane.b32.xlu0 %v392, 127
    %v448 = vpop.permute.xlu0 %447
    %v449 = vsel %vm98, %v446, %v448
    %v450 = vsel %vm98, %v444, %v446
    %v451 = vsel %vm98, %v442, %v444
    %v452 = vsel %vm98, %v448, %v442
    %453 = vrot.lane.b32.xlu0 %v389, 113
    %v454 = vpop.permute.xlu0 %453
    %455 = vrot.lane.b32.xlu0 %v390, 113
    %v456 = vpop.permute.xlu0 %455
    %457 = vrot.lane.b32.xlu0 %v391, 113
    %v458 = vpop.permute.xlu0 %457
    %459 = vrot.lane.b32.xlu0 %v392, 113
    %v460 = vpop.permute.xlu0 %459
    %v461 = vsel %vm111, %v458, %v460
    %v462 = vsel %vm111, %v456, %v458
    %v463 = vsel %vm111, %v454, %v456
    %v464 = vsel %vm111, %v460, %v454
    %465 = vrot.lane.b32.xlu0 %v389, 112
    %v466 = vpop.permute.xlu0 %465
    %467 = vrot.lane.b32.xlu0 %v390, 112
    %v468 = vpop.permute.xlu0 %467
    %469 = vrot.lane.b32.xlu0 %v391, 112
    %v470 = vpop.permute.xlu0 %469
    %471 = vrot.lane.b32.xlu0 %v392, 112
    %v472 = vpop.permute.xlu0 %471
    %v473 = vsel %vm124, %v470, %v472
    %v474 = vsel %vm124, %v468, %v470
    %v475 = vsel %vm124, %v466, %v468
    %v476 = vsel %vm124, %v472, %v466
    %477 = vrot.lane.b32.xlu0 %v389, 111
    %v478 = vpop.permute.xlu0 %477
    %479 = vrot.lane.b32.xlu0 %v390, 111
    %v480 = vpop.permute.xlu0 %479
    %481 = vrot.lane.b32.xlu0 %v391, 111
    %v482 = vpop.permute.xlu0 %481
    %483 = vrot.lane.b32.xlu0 %v392, 111
    %v484 = vpop.permute.xlu0 %483
    %v485 = vsel %vm137, %v482, %v484
    %v486 = vsel %vm137, %v480, %v482
    %v487 = vsel %vm137, %v478, %v480
    %v488 = vsel %vm137, %v484, %v478
    %v489 = vmul.f32 %v404, %v142
    %v490 = vmul.f32 %v403, %v143
    %v491 = vmul.f32 %v402, %v144
    %v492 = vmul.f32 %v401, %v145
    %v493 = vmul.f32 %v416, %v146
    %v494 = vmul.f32 %v415, %v147
    %v495 = vmul.f32 %v414, %v148
    %v496 = vmul.f32 %v413, %v149
    %v497 = vmul.f32 %v428, %v150
    %v498 = vmul.f32 %v427, %v151
    %v499 = vmul.f32 %v426, %v152
    %v500 = vmul.f32 %v425, %v153
    %v501 = vmul.f32 %v440, %v154
    %v502 = vmul.f32 %v439, %v155
    %v503 = vmul.f32 %v438, %v156
    %v504 = vmul.f32 %v437, %v157
    %v505 = vmul.f32 %v389, %v158
    %v506 = vmul.f32 %v390, %v159
    %v507 = vmul.f32 %v391, %v160
    %v508 = vmul.f32 %v392, %v161
    %v509 = vmul.f32 %v451, %v162
    %v510 = vmul.f32 %v450, %v163
    %v511 = vmul.f32 %v449, %v164
    %v512 = vmul.f32 %v452, %v165
    %v513 = vmul.f32 %v463, %v166
    %v514 = vmul.f32 %v462, %v167
    %v515 = vmul.f32 %v461, %v168
    %v516 = vmul.f32 %v464, %v169
    %v517 = vmul.f32 %v475, %v170
    %v518 = vmul.f32 %v474, %v171
    %v519 = vmul.f32 %v473, %v172
    %v520 = vmul.f32 %v476, %v173
    %v521 = vmul.f32 %v487, %v174
    %v522 = vmul.f32 %v486, %v175
    %v523 = vmul.f32 %v485, %v176
    %v524 = vmul.f32 %v488, %v177
    %525 = vmatprep.subr.mxu0 %v490
    %526 = vmatpush1.msra.mxu0 %v489
    %527 = vmatprep.subr.mxu0 %v494
    %528 = vmatpush1.msra.mxu0 %v493
    %529 = vmatprep.subr.mxu0 %v498
    %530 = vmatpush1.msra.mxu0 %v497
    %531 = vmatprep.subr.mxu0 %v502
    %532 = vmatpush1.msra.mxu0 %v501
    %533 = vmatprep.subr.mxu0 %v506
    %534 = vmatpush1.msra.mxu0 %v505
    %535 = vmatprep.subr.mxu0 %v510
    %536 = vmatpush1.msra.mxu0 %v509
    %537 = vmatprep.subr.mxu0 %v514
    %538 = vmatpush1.msra.mxu0 %v513
    %539 = vmatprep.subr.mxu0 %v518
    %540 = vmatpush1.msra.mxu0 %v517
    %541 = vmatprep.subr.mxu0 %v522
    %542 = vmatpush1.msra.mxu0 %v521
    %543 = vmatprep.subr.mxu0 0.0
    %544 = vmatpush1.msra.mxu0 0.0
    %545 = vmatprep.subr.mxu0 0.0
    %546 = vmatpush1.msra.mxu0 0.0
    %547 = vmatprep.subr.mxu0 0.0
    %548 = vmatpush1.msra.mxu0 0.0
    %549 = vmatprep.subr.mxu0 0.0
    %550 = vmatpush1.msra.mxu0 0.0
    %551 = vmatprep.subr.mxu0 0.0
    %552 = vmatpush1.msra.mxu0 0.0
    %553 = vmatprep.subr.mxu0 0.0
    %554 = vmatpush1.msra.mxu0 0.0
    %555 = vmatprep.subr.mxu0 0.0
    %556 = vmatpush1.msra.mxu0 0.0
    %557 = vmatprep.subr.mxu0 0.0
    %558 = vmatpush1.msra.mxu0 0.0
    %559 = vmatprep.subr.mxu0 0.0
    %560 = vmatpush1.msra.mxu0 0.0
    %561 = vmatprep.subr.mxu0 0.0
    %562 = vmatpush1.msra.mxu0 0.0
    %563 = vmatprep.subr.mxu0 0.0
    %564 = vmatpush1.msra.mxu0 0.0
    %565 = vmatprep.subr.mxu0 0.0
    %566 = vmatpush1.msra.mxu0 0.0
    %567 = vmatprep.subr.mxu0 0.0
    %568 = vmatpush1.msra.mxu0 0.0
    %569 = vmatprep.subr.mxu0 0.0
    %570 = vmatpush1.msra.mxu0 0.0
    %571 = vmatprep.subr.mxu0 0.0
    %572 = vmatpush1.msra.mxu0 0.0
    %573 = vmatprep.subr.mxu0 0.0
    %574 = vmatpush1.msra.mxu0 0.0
    %575 = vmatprep.subr.mxu0 0.0
    %576 = vmatpush1.msra.mxu0 0.0
    %577 = vmatprep.subr.mxu0 0.0
    %578 = vmatpush1.msra.mxu0 0.0
    %579 = vmatprep.subr.mxu0 0.0
    %580 = vmatpush1.msra.mxu0 0.0
    %581 = vmatprep.subr.mxu0 0.0
    %582 = vmatpush1.msra.mxu0 0.0
    %583 = vmatprep.subr.mxu0 0.0
    %584 = vmatpush1.msra.mxu0 0.0
    %585 = vmatprep.subr.mxu0 0.0
    %586 = vmatpush1.msra.mxu0 0.0
    %587 = vmatprep.subr.mxu0 0.0
    %588 = vmatpush1.msra.mxu0 0.0
    %589 = vmatprep.mubr.f32.mxu0 0.0
    %590 = vmatmul.mubr.f32.gmra.mrb[0].mxu0 %v223
    %v591 = vpop.f32.mrb[0].mxu0
    %v592 = vadd.f32 %v219, %v591
    %v593 = vpop.f32.mrb[0].mxu0
    %v594 = vadd.f32 %v219, %v593
    %595 = vdwg.mxu0
    %596 = vmatprep.subr.mxu0 %v492
    %597 = vmatpush1.msra.mxu0 %v491
    %598 = vmatprep.subr.mxu0 %v496
    %599 = vmatpush1.msra.mxu0 %v495
    %600 = vmatprep.subr.mxu0 %v500
    %601 = vmatpush1.msra.mxu0 %v499
    %602 = vmatprep.subr.mxu0 %v504
    %603 = vmatpush1.msra.mxu0 %v503
    %604 = vmatprep.subr.mxu0 %v508
    %605 = vmatpush1.msra.mxu0 %v507
    %606 = vmatprep.subr.mxu0 %v512
    %607 = vmatpush1.msra.mxu0 %v511
    %608 = vmatprep.subr.mxu0 %v516
    %609 = vmatpush1.msra.mxu0 %v515
    %610 = vmatprep.subr.mxu0 %v520
    %611 = vmatpush1.msra.mxu0 %v519
    %612 = vmatprep.subr.mxu0 %v524
    %613 = vmatpush1.msra.mxu0 %v523
    %614 = vmatprep.subr.mxu0 0.0
    %615 = vmatpush1.msra.mxu0 0.0
    %616 = vmatprep.subr.mxu0 0.0
    %617 = vmatpush1.msra.mxu0 0.0
    %618 = vmatprep.subr.mxu0 0.0
    %619 = vmatpush1.msra.mxu0 0.0
    %620 = vmatprep.subr.mxu0 0.0
    %621 = vmatpush1.msra.mxu0 0.0
    %622 = vmatprep.subr.mxu0 0.0
    %623 = vmatpush1.msra.mxu0 0.0
    %624 = vmatprep.subr.mxu0 0.0
    %625 = vmatpush1.msra.mxu0 0.0
    %626 = vmatprep.subr.mxu0 0.0
    %627 = vmatpush1.msra.mxu0 0.0
    %628 = vmatprep.subr.mxu0 0.0
    %629 = vmatpush1.msra.mxu0 0.0
    %630 = vmatprep.subr.mxu0 0.0
    %631 = vmatpush1.msra.mxu0 0.0
    %632 = vmatprep.subr.mxu0 0.0
    %633 = vmatpush1.msra.mxu0 0.0
    %634 = vmatprep.subr.mxu0 0.0
    %635 = vmatpush1.msra.mxu0 0.0
    %636 = vmatprep.subr.mxu0 0.0
    %637 = vmatpush1.msra.mxu0 0.0
    %638 = vmatprep.subr.mxu0 0.0
    %639 = vmatpush1.msra.mxu0 0.0
    %640 = vmatprep.subr.mxu0 0.0
    %641 = vmatpush1.msra.mxu0 0.0
    %642 = vmatprep.subr.mxu0 0.0
    %643 = vmatpush1.msra.mxu0 0.0
    %644 = vmatprep.subr.mxu0 0.0
    %645 = vmatpush1.msra.mxu0 0.0
    %646 = vmatprep.subr.mxu0 0.0
    %647 = vmatpush1.msra.mxu0 0.0
    %648 = vmatprep.subr.mxu0 0.0
    %649 = vmatpush1.msra.mxu0 0.0
    %650 = vmatprep.subr.mxu0 0.0
    %651 = vmatpush1.msra.mxu0 0.0
    %652 = vmatprep.subr.mxu0 0.0
    %653 = vmatpush1.msra.mxu0 0.0
    %654 = vmatprep.subr.mxu0 0.0
    %655 = vmatpush1.msra.mxu0 0.0
    %656 = vmatprep.subr.mxu0 0.0
    %657 = vmatpush1.msra.mxu0 0.0
    %658 = vmatprep.subr.mxu0 0.0
    %659 = vmatpush1.msra.mxu0 0.0
    %660 = vmatprep.mubr.f32.mxu0 0.0
    %661 = vmatmul.mubr.f32.gmra.mrb[0].mxu0 %v223
    %v662 = vpop.f32.mrb[0].mxu0
    %v663 = vadd.f32 %v219, %v662
    %v664 = vpop.f32.mrb[0].mxu0
    %v665 = vadd.f32 %v219, %v664
    %666 = vdwg.mxu0
    %v667 = vstv %s384
    %v668 = vmul.f32 %v667, %v367
    %v669 = vmul.f32 %v667, %v368
    %v670 = vmul.f32 %v667, %v369
    %v671 = vmul.f32 %v667, %v370
    %v672 = vadd.f32 %v592, %v668
    %v673 = vadd.f32 %v594, %v669
    %v674 = vadd.f32 %v663, %v670
    %v675 = vadd.f32 %v665, %v671
    %v676 = vtanh.pop %v672
    %v677 = vtanh.pop %v673
    %v678 = vtanh.pop %v674
    %v679 = vtanh.pop %v675
    %v680 = vmul.f32 %v676, 0.0625
    %v681 = vmul.f32 %v677, 0.0625
    %v682 = vmul.f32 %v678, 0.0625
    %v683 = vmul.f32 %v679, 0.0625
    %v684 = vadd.f32 %v30, %v680
    %v685 = vadd.f32 %v31, %v681
    %v686 = vadd.f32 %v32, %v682
    %v687 = vadd.f32 %v33, %v683
    %688 = vrot.lane.b32.xlu0 %v684, 17
    %v689 = vpop.permute.xlu0 %688
    %690 = vrot.lane.b32.xlu0 %v685, 17
    %v691 = vpop.permute.xlu0 %690
    %692 = vrot.lane.b32.xlu0 %v686, 17
    %v693 = vpop.permute.xlu0 %692
    %694 = vrot.lane.b32.xlu0 %v687, 17
    %v695 = vpop.permute.xlu0 %694
    %v696 = vsel %vm46, %v693, %v695
    %v697 = vsel %vm46, %v691, %v693
    %v698 = vsel %vm46, %v689, %v691
    %v699 = vsel %vm46, %v695, %v689
    %700 = vrot.lane.b32.xlu0 %v684, 16
    %v701 = vpop.permute.xlu0 %700
    %702 = vrot.lane.b32.xlu0 %v685, 16
    %v703 = vpop.permute.xlu0 %702
    %704 = vrot.lane.b32.xlu0 %v686, 16
    %v705 = vpop.permute.xlu0 %704
    %706 = vrot.lane.b32.xlu0 %v687, 16
    %v707 = vpop.permute.xlu0 %706
    %v708 = vsel %vm59, %v705, %v707
    %v709 = vsel %vm59, %v703, %v705
    %v710 = vsel %vm59, %v701, %v703
    %v711 = vsel %vm59, %v707, %v701
    %712 = vrot.lane.b32.xlu0 %v684, 15
    %v713 = vpop.permute.xlu0 %712
    %714 = vrot.lane.b32.xlu0 %v685, 15
    %v715 = vpop.permute.xlu0 %714
    %716 = vrot.lane.b32.xlu0 %v686, 15
    %v717 = vpop.permute.xlu0 %716
    %718 = vrot.lane.b32.xlu0 %v687, 15
    %v719 = vpop.permute.xlu0 %718
    %v720 = vsel %vm72, %v717, %v719
    %v721 = vsel %vm72, %v715, %v717
    %v722 = vsel %vm72, %v713, %v715
    %v723 = vsel %vm72, %v719, %v713
    %724 = vrot.lane.b32.xlu0 %v684, 1
    %v725 = vpop.permute.xlu0 %724
    %726 = vrot.lane.b32.xlu0 %v685, 1
    %v727 = vpop.permute.xlu0 %726
    %728 = vrot.lane.b32.xlu0 %v686, 1
    %v729 = vpop.permute.xlu0 %728
    %730 = vrot.lane.b32.xlu0 %v687, 1
    %v731 = vpop.permute.xlu0 %730
    %v732 = vsel %vm85, %v729, %v731
    %v733 = vsel %vm85, %v727, %v729
    %v734 = vsel %vm85, %v725, %v727
    %v735 = vsel %vm85, %v731, %v725
    %736 = vrot.lane.b32.xlu0 %v684, 127
    %v737 = vpop.permute.xlu0 %736
    %738 = vrot.lane.b32.xlu0 %v685, 127
    %v739 = vpop.permute.xlu0 %738
    %740 = vrot.lane.b32.xlu0 %v686, 127
    %v741 = vpop.permute.xlu0 %740
    %742 = vrot.lane.b32.xlu0 %v687, 127
    %v743 = vpop.permute.xlu0 %742
    %v744 = vsel %vm98, %v741, %v743
    %v745 = vsel %vm98, %v739, %v741
    %v746 = vsel %vm98, %v737, %v739
    %v747 = vsel %vm98, %v743, %v737
    %748 = vrot.lane.b32.xlu0 %v684, 113
    %v749 = vpop.permute.xlu0 %748
    %750 = vrot.lane.b32.xlu0 %v685, 113
    %v751 = vpop.permute.xlu0 %750
    %752 = vrot.lane.b32.xlu0 %v686, 113
    %v753 = vpop.permute.xlu0 %752
    %754 = vrot.lane.b32.xlu0 %v687, 113
    %v755 = vpop.permute.xlu0 %754
    %v756 = vsel %vm111, %v753, %v755
    %v757 = vsel %vm111, %v751, %v753
    %v758 = vsel %vm111, %v749, %v751
    %v759 = vsel %vm111, %v755, %v749
    %760 = vrot.lane.b32.xlu0 %v684, 112
    %v761 = vpop.permute.xlu0 %760
    %762 = vrot.lane.b32.xlu0 %v685, 112
    %v763 = vpop.permute.xlu0 %762
    %764 = vrot.lane.b32.xlu0 %v686, 112
    %v765 = vpop.permute.xlu0 %764
    %766 = vrot.lane.b32.xlu0 %v687, 112
    %v767 = vpop.permute.xlu0 %766
    %v768 = vsel %vm124, %v765, %v767
    %v769 = vsel %vm124, %v763, %v765
    %v770 = vsel %vm124, %v761, %v763
    %v771 = vsel %vm124, %v767, %v761
    %772 = vrot.lane.b32.xlu0 %v684, 111
    %v773 = vpop.permute.xlu0 %772
    %774 = vrot.lane.b32.xlu0 %v685, 111
    %v775 = vpop.permute.xlu0 %774
    %776 = vrot.lane.b32.xlu0 %v686, 111
    %v777 = vpop.permute.xlu0 %776
    %778 = vrot.lane.b32.xlu0 %v687, 111
    %v779 = vpop.permute.xlu0 %778
    %v780 = vsel %vm137, %v777, %v779
    %v781 = vsel %vm137, %v775, %v777
    %v782 = vsel %vm137, %v773, %v775
    %v783 = vsel %vm137, %v779, %v773
    %v784 = vmul.f32 %v699, %v142
    %v785 = vmul.f32 %v698, %v143
    %v786 = vmul.f32 %v697, %v144
    %v787 = vmul.f32 %v696, %v145
    %v788 = vmul.f32 %v711, %v146
    %v789 = vmul.f32 %v710, %v147
    %v790 = vmul.f32 %v709, %v148
    %v791 = vmul.f32 %v708, %v149
    %v792 = vmul.f32 %v723, %v150
    %v793 = vmul.f32 %v722, %v151
    %v794 = vmul.f32 %v721, %v152
    %v795 = vmul.f32 %v720, %v153
    %v796 = vmul.f32 %v735, %v154
    %v797 = vmul.f32 %v734, %v155
    %v798 = vmul.f32 %v733, %v156
    %v799 = vmul.f32 %v732, %v157
    %v800 = vmul.f32 %v684, %v158
    %v801 = vmul.f32 %v685, %v159
    %v802 = vmul.f32 %v686, %v160
    %v803 = vmul.f32 %v687, %v161
    %v804 = vmul.f32 %v746, %v162
    %v805 = vmul.f32 %v745, %v163
    %v806 = vmul.f32 %v744, %v164
    %v807 = vmul.f32 %v747, %v165
    %v808 = vmul.f32 %v758, %v166
    %v809 = vmul.f32 %v757, %v167
    %v810 = vmul.f32 %v756, %v168
    %v811 = vmul.f32 %v759, %v169
    %v812 = vmul.f32 %v770, %v170
    %v813 = vmul.f32 %v769, %v171
    %v814 = vmul.f32 %v768, %v172
    %v815 = vmul.f32 %v771, %v173
    %v816 = vmul.f32 %v782, %v174
    %v817 = vmul.f32 %v781, %v175
    %v818 = vmul.f32 %v780, %v176
    %v819 = vmul.f32 %v783, %v177
    %820 = vmatprep.subr.mxu0 %v785
    %821 = vmatpush1.msra.mxu0 %v784
    %822 = vmatprep.subr.mxu0 %v789
    %823 = vmatpush1.msra.mxu0 %v788
    %824 = vmatprep.subr.mxu0 %v793
    %825 = vmatpush1.msra.mxu0 %v792
    %826 = vmatprep.subr.mxu0 %v797
    %827 = vmatpush1.msra.mxu0 %v796
    %828 = vmatprep.subr.mxu0 %v801
    %829 = vmatpush1.msra.mxu0 %v800
    %830 = vmatprep.subr.mxu0 %v805
    %831 = vmatpush1.msra.mxu0 %v804
    %832 = vmatprep.subr.mxu0 %v809
    %833 = vmatpush1.msra.mxu0 %v808
    %834 = vmatprep.subr.mxu0 %v813
    %835 = vmatpush1.msra.mxu0 %v812
    %836 = vmatprep.subr.mxu0 %v817
    %837 = vmatpush1.msra.mxu0 %v816
    %838 = vmatprep.subr.mxu0 0.0
    %839 = vmatpush1.msra.mxu0 0.0
    %840 = vmatprep.subr.mxu0 0.0
    %841 = vmatpush1.msra.mxu0 0.0
    %842 = vmatprep.subr.mxu0 0.0
    %843 = vmatpush1.msra.mxu0 0.0
    %844 = vmatprep.subr.mxu0 0.0
    %845 = vmatpush1.msra.mxu0 0.0
    %846 = vmatprep.subr.mxu0 0.0
    %847 = vmatpush1.msra.mxu0 0.0
    %848 = vmatprep.subr.mxu0 0.0
    %849 = vmatpush1.msra.mxu0 0.0
    %850 = vmatprep.subr.mxu0 0.0
    %851 = vmatpush1.msra.mxu0 0.0
    %852 = vmatprep.subr.mxu0 0.0
    %853 = vmatpush1.msra.mxu0 0.0
    %854 = vmatprep.subr.mxu0 0.0
    %855 = vmatpush1.msra.mxu0 0.0
    %856 = vmatprep.subr.mxu0 0.0
    %857 = vmatpush1.msra.mxu0 0.0
    %858 = vmatprep.subr.mxu0 0.0
    %859 = vmatpush1.msra.mxu0 0.0
    %860 = vmatprep.subr.mxu0 0.0
    %861 = vmatpush1.msra.mxu0 0.0
    %862 = vmatprep.subr.mxu0 0.0
    %863 = vmatpush1.msra.mxu0 0.0
    %864 = vmatprep.subr.mxu0 0.0
    %865 = vmatpush1.msra.mxu0 0.0
    %866 = vmatprep.subr.mxu0 0.0
    %867 = vmatpush1.msra.mxu0 0.0
    %868 = vmatprep.subr.mxu0 0.0
    %869 = vmatpush1.msra.mxu0 0.0
    %870 = vmatprep.subr.mxu0 0.0
    %871 = vmatpush1.msra.mxu0 0.0
    %872 = vmatprep.subr.mxu0 0.0
    %873 = vmatpush1.msra.mxu0 0.0
    %874 = vmatprep.subr.mxu0 0.0
    %875 = vmatpush1.msra.mxu0 0.0
    %876 = vmatprep.subr.mxu0 0.0
    %877 = vmatpush1.msra.mxu0 0.0
    %878 = vmatprep.subr.mxu0 0.0
    %879 = vmatpush1.msra.mxu0 0.0
    %880 = vmatprep.subr.mxu0 0.0
    %881 = vmatpush1.msra.mxu0 0.0
    %882 = vmatprep.subr.mxu0 0.0
    %883 = vmatpush1.msra.mxu0 0.0
    %884 = vmatprep.mubr.f32.mxu0 0.0
    %885 = vmatmul.mubr.f32.gmra.mrb[0].mxu0 %v223
    %v886 = vpop.f32.mrb[0].mxu0
    %v887 = vadd.f32 %v219, %v886
    %v888 = vpop.f32.mrb[0].mxu0
    %v889 = vadd.f32 %v219, %v888
    %890 = vdwg.mxu0
    %891 = vmatprep.subr.mxu0 %v787
    %892 = vmatpush1.msra.mxu0 %v786
    %893 = vmatprep.subr.mxu0 %v791
    %894 = vmatpush1.msra.mxu0 %v790
    %895 = vmatprep.subr.mxu0 %v795
    %896 = vmatpush1.msra.mxu0 %v794
    %897 = vmatprep.subr.mxu0 %v799
    %898 = vmatpush1.msra.mxu0 %v798
    %899 = vmatprep.subr.mxu0 %v803
    %900 = vmatpush1.msra.mxu0 %v802
    %901 = vmatprep.subr.mxu0 %v807
    %902 = vmatpush1.msra.mxu0 %v806
    %903 = vmatprep.subr.mxu0 %v811
    %904 = vmatpush1.msra.mxu0 %v810
    %905 = vmatprep.subr.mxu0 %v815
    %906 = vmatpush1.msra.mxu0 %v814
    %907 = vmatprep.subr.mxu0 %v819
    %908 = vmatpush1.msra.mxu0 %v818
    %909 = vmatprep.subr.mxu0 0.0
    %910 = vmatpush1.msra.mxu0 0.0
    %911 = vmatprep.subr.mxu0 0.0
    %912 = vmatpush1.msra.mxu0 0.0
    %913 = vmatprep.subr.mxu0 0.0
    %914 = vmatpush1.msra.mxu0 0.0
    %915 = vmatprep.subr.mxu0 0.0
    %916 = vmatpush1.msra.mxu0 0.0
    %917 = vmatprep.subr.mxu0 0.0
    %918 = vmatpush1.msra.mxu0 0.0
    %919 = vmatprep.subr.mxu0 0.0
    %920 = vmatpush1.msra.mxu0 0.0
    %921 = vmatprep.subr.mxu0 0.0
    %922 = vmatpush1.msra.mxu0 0.0
    %923 = vmatprep.subr.mxu0 0.0
    %924 = vmatpush1.msra.mxu0 0.0
    %925 = vmatprep.subr.mxu0 0.0
    %926 = vmatpush1.msra.mxu0 0.0
    %927 = vmatprep.subr.mxu0 0.0
    %928 = vmatpush1.msra.mxu0 0.0
    %929 = vmatprep.subr.mxu0 0.0
    %930 = vmatpush1.msra.mxu0 0.0
    %931 = vmatprep.subr.mxu0 0.0
    %932 = vmatpush1.msra.mxu0 0.0
    %933 = vmatprep.subr.mxu0 0.0
    %934 = vmatpush1.msra.mxu0 0.0
    %935 = vmatprep.subr.mxu0 0.0
    %936 = vmatpush1.msra.mxu0 0.0
    %937 = vmatprep.subr.mxu0 0.0
    %938 = vmatpush1.msra.mxu0 0.0
    %939 = vmatprep.subr.mxu0 0.0
    %940 = vmatpush1.msra.mxu0 0.0
    %941 = vmatprep.subr.mxu0 0.0
    %942 = vmatpush1.msra.mxu0 0.0
    %943 = vmatprep.subr.mxu0 0.0
    %944 = vmatpush1.msra.mxu0 0.0
    %945 = vmatprep.subr.mxu0 0.0
    %946 = vmatpush1.msra.mxu0 0.0
    %947 = vmatprep.subr.mxu0 0.0
    %948 = vmatpush1.msra.mxu0 0.0
    %949 = vmatprep.subr.mxu0 0.0
    %950 = vmatpush1.msra.mxu0 0.0
    %951 = vmatprep.subr.mxu0 0.0
    %952 = vmatpush1.msra.mxu0 0.0
    %953 = vmatprep.subr.mxu0 0.0
    %954 = vmatpush1.msra.mxu0 0.0
    %955 = vmatprep.mubr.f32.mxu0 0.0
    %956 = vmatmul.mubr.f32.gmra.mrb[0].mxu0 %v223
    %v957 = vpop.f32.mrb[0].mxu0
    %v958 = vadd.f32 %v219, %v957
    %v959 = vpop.f32.mrb[0].mxu0
    %v960 = vadd.f32 %v219, %v959
    %961 = vdwg.mxu0
    %v962 = vadd.f32 %v887, %v668
    %v963 = vadd.f32 %v889, %v669
    %v964 = vadd.f32 %v958, %v670
    %v965 = vadd.f32 %v960, %v671
    %v966 = vtanh.pop %v962
    %v967 = vtanh.pop %v963
    %v968 = vtanh.pop %v964
    %v969 = vtanh.pop %v965
    %s970 = sadd.f32 %s35, 0.125
    %v971 = vmul.f32 %v966, 0.125
    %v972 = vmul.f32 %v967, 0.125
    %v973 = vmul.f32 %v968, 0.125
    %v974 = vmul.f32 %v969, 0.125
    %v975 = vadd.f32 %v30, %v971
    %v976 = vadd.f32 %v31, %v972
    %v977 = vadd.f32 %v32, %v973
    %v978 = vadd.f32 %v33, %v974
    %979 = vrot.lane.b32.xlu0 %v975, 17
    %v980 = vpop.permute.xlu0 %979
    %981 = vrot.lane.b32.xlu0 %v976, 17
    %v982 = vpop.permute.xlu0 %981
    %983 = vrot.lane.b32.xlu0 %v977, 17
    %v984 = vpop.permute.xlu0 %983
    %985 = vrot.lane.b32.xlu0 %v978, 17
    %v986 = vpop.permute.xlu0 %985
    %v987 = vsel %vm46, %v984, %v986
    %v988 = vsel %vm46, %v982, %v984
    %v989 = vsel %vm46, %v980, %v982
    %v990 = vsel %vm46, %v986, %v980
    %991 = vrot.lane.b32.xlu0 %v975, 16
    %v992 = vpop.permute.xlu0 %991
    %993 = vrot.lane.b32.xlu0 %v976, 16
    %v994 = vpop.permute.xlu0 %993
    %995 = vrot.lane.b32.xlu0 %v977, 16
    %v996 = vpop.permute.xlu0 %995
    %997 = vrot.lane.b32.xlu0 %v978, 16
    %v998 = vpop.permute.xlu0 %997
    %v999 = vsel %vm59, %v996, %v998
    %v1000 = vsel %vm59, %v994, %v996
    %v1001 = vsel %vm59, %v992, %v994
    %v1002 = vsel %vm59, %v998, %v992
    %1003 = vrot.lane.b32.xlu0 %v975, 15
    %v1004 = vpop.permute.xlu0 %1003
    %1005 = vrot.lane.b32.xlu0 %v976, 15
    %v1006 = vpop.permute.xlu0 %1005
    %1007 = vrot.lane.b32.xlu0 %v977, 15
    %v1008 = vpop.permute.xlu0 %1007
    %1009 = vrot.lane.b32.xlu0 %v978, 15
    %v1010 = vpop.permute.xlu0 %1009
    %v1011 = vsel %vm72, %v1008, %v1010
    %v1012 = vsel %vm72, %v1006, %v1008
    %v1013 = vsel %vm72, %v1004, %v1006
    %v1014 = vsel %vm72, %v1010, %v1004
    %1015 = vrot.lane.b32.xlu0 %v975, 1
    %v1016 = vpop.permute.xlu0 %1015
    %1017 = vrot.lane.b32.xlu0 %v976, 1
    %v1018 = vpop.permute.xlu0 %1017
    %1019 = vrot.lane.b32.xlu0 %v977, 1
    %v1020 = vpop.permute.xlu0 %1019
    %1021 = vrot.lane.b32.xlu0 %v978, 1
    %v1022 = vpop.permute.xlu0 %1021
    %v1023 = vsel %vm85, %v1020, %v1022
    %v1024 = vsel %vm85, %v1018, %v1020
    %v1025 = vsel %vm85, %v1016, %v1018
    %v1026 = vsel %vm85, %v1022, %v1016
    %1027 = vrot.lane.b32.xlu0 %v975, 127
    %v1028 = vpop.permute.xlu0 %1027
    %1029 = vrot.lane.b32.xlu0 %v976, 127
    %v1030 = vpop.permute.xlu0 %1029
    %1031 = vrot.lane.b32.xlu0 %v977, 127
    %v1032 = vpop.permute.xlu0 %1031
    %1033 = vrot.lane.b32.xlu0 %v978, 127
    %v1034 = vpop.permute.xlu0 %1033
    %v1035 = vsel %vm98, %v1032, %v1034
    %v1036 = vsel %vm98, %v1030, %v1032
    %v1037 = vsel %vm98, %v1028, %v1030
    %v1038 = vsel %vm98, %v1034, %v1028
    %1039 = vrot.lane.b32.xlu0 %v975, 113
    %v1040 = vpop.permute.xlu0 %1039
    %1041 = vrot.lane.b32.xlu0 %v976, 113
    %v1042 = vpop.permute.xlu0 %1041
    %1043 = vrot.lane.b32.xlu0 %v977, 113
    %v1044 = vpop.permute.xlu0 %1043
    %1045 = vrot.lane.b32.xlu0 %v978, 113
    %v1046 = vpop.permute.xlu0 %1045
    %v1047 = vsel %vm111, %v1044, %v1046
    %v1048 = vsel %vm111, %v1042, %v1044
    %v1049 = vsel %vm111, %v1040, %v1042
    %v1050 = vsel %vm111, %v1046, %v1040
    %1051 = vrot.lane.b32.xlu0 %v975, 112
    %v1052 = vpop.permute.xlu0 %1051
    %1053 = vrot.lane.b32.xlu0 %v976, 112
    %v1054 = vpop.permute.xlu0 %1053
    %1055 = vrot.lane.b32.xlu0 %v977, 112
    %v1056 = vpop.permute.xlu0 %1055
    %1057 = vrot.lane.b32.xlu0 %v978, 112
    %v1058 = vpop.permute.xlu0 %1057
    %v1059 = vsel %vm124, %v1056, %v1058
    %v1060 = vsel %vm124, %v1054, %v1056
    %v1061 = vsel %vm124, %v1052, %v1054
    %v1062 = vsel %vm124, %v1058, %v1052
    %1063 = vrot.lane.b32.xlu0 %v975, 111
    %v1064 = vpop.permute.xlu0 %1063
    %1065 = vrot.lane.b32.xlu0 %v976, 111
    %v1066 = vpop.permute.xlu0 %1065
    %1067 = vrot.lane.b32.xlu0 %v977, 111
    %v1068 = vpop.permute.xlu0 %1067
    %1069 = vrot.lane.b32.xlu0 %v978, 111
    %v1070 = vpop.permute.xlu0 %1069
    %v1071 = vsel %vm137, %v1068, %v1070
    %v1072 = vsel %vm137, %v1066, %v1068
    %v1073 = vsel %vm137, %v1064, %v1066
    %v1074 = vsel %vm137, %v1070, %v1064
    %v1075 = vmul.f32 %v990, %v142
    %v1076 = vmul.f32 %v989, %v143
    %v1077 = vmul.f32 %v988, %v144
    %v1078 = vmul.f32 %v987, %v145
    %v1079 = vmul.f32 %v1002, %v146
    %v1080 = vmul.f32 %v1001, %v147
    %v1081 = vmul.f32 %v1000, %v148
    %v1082 = vmul.f32 %v999, %v149
    %v1083 = vmul.f32 %v1014, %v150
    %v1084 = vmul.f32 %v1013, %v151
    %v1085 = vmul.f32 %v1012, %v152
    %v1086 = vmul.f32 %v1011, %v153
    %v1087 = vmul.f32 %v1026, %v154
    %v1088 = vmul.f32 %v1025, %v155
    %v1089 = vmul.f32 %v1024, %v156
    %v1090 = vmul.f32 %v1023, %v157
    %v1091 = vmul.f32 %v975, %v158
    %v1092 = vmul.f32 %v976, %v159
    %v1093 = vmul.f32 %v977, %v160
    %v1094 = vmul.f32 %v978, %v161
    %v1095 = vmul.f32 %v1037, %v162
    %v1096 = vmul.f32 %v1036, %v163
    %v1097 = vmul.f32 %v1035, %v164
    %v1098 = vmul.f32 %v1038, %v165
    %v1099 = vmul.f32 %v1049, %v166
    %v1100 = vmul.f32 %v1048, %v167
    %v1101 = vmul.f32 %v1047, %v168
    %v1102 = vmul.f32 %v1050, %v169
    %v1103 = vmul.f32 %v1061, %v170
    %v1104 = vmul.f32 %v1060, %v171
    %v1105 = vmul.f32 %v1059, %v172
    %v1106 = vmul.f32 %v1062, %v173
    %v1107 = vmul.f32 %v1073, %v174
    %v1108 = vmul.f32 %v1072, %v175
    %v1109 = vmul.f32 %v1071, %v176
    %v1110 = vmul.f32 %v1074, %v177
    %1111 = vmatprep.subr.mxu0 %v1076
    %1112 = vmatpush1.msra.mxu0 %v1075
    %1113 = vmatprep.subr.mxu0 %v1080
    %1114 = vmatpush1.msra.mxu0 %v1079
    %1115 = vmatprep.subr.mxu0 %v1084
    %1116 = vmatpush1.msra.mxu0 %v1083
    %1117 = vmatprep.subr.mxu0 %v1088
    %1118 = vmatpush1.msra.mxu0 %v1087
    %1119 = vmatprep.subr.mxu0 %v1092
    %1120 = vmatpush1.msra.mxu0 %v1091
    %1121 = vmatprep.subr.mxu0 %v1096
    %1122 = vmatpush1.msra.mxu0 %v1095
    %1123 = vmatprep.subr.mxu0 %v1100
    %1124 = vmatpush1.msra.mxu0 %v1099
    %1125 = vmatprep.subr.mxu0 %v1104
    %1126 = vmatpush1.msra.mxu0 %v1103
    %1127 = vmatprep.subr.mxu0 %v1108
    %1128 = vmatpush1.msra.mxu0 %v1107
    %1129 = vmatprep.subr.mxu0 0.0
    %1130 = vmatpush1.msra.mxu0 0.0
    %1131 = vmatprep.subr.mxu0 0.0
    %1132 = vmatpush1.msra.mxu0 0.0
    %1133 = vmatprep.subr.mxu0 0.0
    %1134 = vmatpush1.msra.mxu0 0.0
    %1135 = vmatprep.subr.mxu0 0.0
    %1136 = vmatpush1.msra.mxu0 0.0
    %1137 = vmatprep.subr.mxu0 0.0
    %1138 = vmatpush1.msra.mxu0 0.0
    %1139 = vmatprep.subr.mxu0 0.0
    %1140 = vmatpush1.msra.mxu0 0.0
    %1141 = vmatprep.subr.mxu0 0.0
    %1142 = vmatpush1.msra.mxu0 0.0
    %1143 = vmatprep.subr.mxu0 0.0
    %1144 = vmatpush1.msra.mxu0 0.0
    %1145 = vmatprep.subr.mxu0 0.0
    %1146 = vmatpush1.msra.mxu0 0.0
    %1147 = vmatprep.subr.mxu0 0.0
    %1148 = vmatpush1.msra.mxu0 0.0
    %1149 = vmatprep.subr.mxu0 0.0
    %1150 = vmatpush1.msra.mxu0 0.0
    %1151 = vmatprep.subr.mxu0 0.0
    %1152 = vmatpush1.msra.mxu0 0.0
    %1153 = vmatprep.subr.mxu0 0.0
    %1154 = vmatpush1.msra.mxu0 0.0
    %1155 = vmatprep.subr.mxu0 0.0
    %1156 = vmatpush1.msra.mxu0 0.0
    %1157 = vmatprep.subr.mxu0 0.0
    %1158 = vmatpush1.msra.mxu0 0.0
    %1159 = vmatprep.subr.mxu0 0.0
    %1160 = vmatpush1.msra.mxu0 0.0
    %1161 = vmatprep.subr.mxu0 0.0
    %1162 = vmatpush1.msra.mxu0 0.0
    %1163 = vmatprep.subr.mxu0 0.0
    %1164 = vmatpush1.msra.mxu0 0.0
    %1165 = vmatprep.subr.mxu0 0.0
    %1166 = vmatpush1.msra.mxu0 0.0
    %1167 = vmatprep.subr.mxu0 0.0
    %1168 = vmatpush1.msra.mxu0 0.0
    %1169 = vmatprep.subr.mxu0 0.0
    %1170 = vmatpush1.msra.mxu0 0.0
    %1171 = vmatprep.subr.mxu0 0.0
    %1172 = vmatpush1.msra.mxu0 0.0
    %1173 = vmatprep.subr.mxu0 0.0
    %1174 = vmatpush1.msra.mxu0 0.0
    %1175 = vmatprep.mubr.f32.mxu0 0.0
    %1176 = vmatmul.mubr.f32.gmra.mrb[0].mxu0 %v223
    %v1177 = vpop.f32.mrb[0].mxu0
    %v1178 = vadd.f32 %v219, %v1177
    %v1179 = vpop.f32.mrb[0].mxu0
    %v1180 = vadd.f32 %v219, %v1179
    %1181 = vdwg.mxu0
    %1182 = vmatprep.subr.mxu0 %v1078
    %1183 = vmatpush1.msra.mxu0 %v1077
    %1184 = vmatprep.subr.mxu0 %v1082
    %1185 = vmatpush1.msra.mxu0 %v1081
    %1186 = vmatprep.subr.mxu0 %v1086
    %1187 = vmatpush1.msra.mxu0 %v1085
    %1188 = vmatprep.subr.mxu0 %v1090
    %1189 = vmatpush1.msra.mxu0 %v1089
    %1190 = vmatprep.subr.mxu0 %v1094
    %1191 = vmatpush1.msra.mxu0 %v1093
    %1192 = vmatprep.subr.mxu0 %v1098
    %1193 = vmatpush1.msra.mxu0 %v1097
    %1194 = vmatprep.subr.mxu0 %v1102
    %1195 = vmatpush1.msra.mxu0 %v1101
    %1196 = vmatprep.subr.mxu0 %v1106
    %1197 = vmatpush1.msra.mxu0 %v1105
    %1198 = vmatprep.subr.mxu0 %v1110
    %1199 = vmatpush1.msra.mxu0 %v1109
    %1200 = vmatprep.subr.mxu0 0.0
    %1201 = vmatpush1.msra.mxu0 0.0
    %1202 = vmatprep.subr.mxu0 0.0
    %1203 = vmatpush1.msra.mxu0 0.0
    %1204 = vmatprep.subr.mxu0 0.0
    %1205 = vmatpush1.msra.mxu0 0.0
    %1206 = vmatprep.subr.mxu0 0.0
    %1207 = vmatpush1.msra.mxu0 0.0
    %1208 = vmatprep.subr.mxu0 0.0
    %1209 = vmatpush1.msra.mxu0 0.0
    %1210 = vmatprep.subr.mxu0 0.0
    %1211 = vmatpush1.msra.mxu0 0.0
    %1212 = vmatprep.subr.mxu0 0.0
    %1213 = vmatpush1.msra.mxu0 0.0
    %1214 = vmatprep.subr.mxu0 0.0
    %1215 = vmatpush1.msra.mxu0 0.0
    %1216 = vmatprep.subr.mxu0 0.0
    %1217 = vmatpush1.msra.mxu0 0.0
    %1218 = vmatprep.subr.mxu0 0.0
    %1219 = vmatpush1.msra.mxu0 0.0
    %1220 = vmatprep.subr.mxu0 0.0
    %1221 = vmatpush1.msra.mxu0 0.0
    %1222 = vmatprep.subr.mxu0 0.0
    %1223 = vmatpush1.msra.mxu0 0.0
    %1224 = vmatprep.subr.mxu0 0.0
    %1225 = vmatpush1.msra.mxu0 0.0
    %1226 = vmatprep.subr.mxu0 0.0
    %1227 = vmatpush1.msra.mxu0 0.0
    %1228 = vmatprep.subr.mxu0 0.0
    %1229 = vmatpush1.msra.mxu0 0.0
    %1230 = vmatprep.subr.mxu0 0.0
    %1231 = vmatpush1.msra.mxu0 0.0
    %1232 = vmatprep.subr.mxu0 0.0
    %1233 = vmatpush1.msra.mxu0 0.0
    %1234 = vmatprep.subr.mxu0 0.0
    %1235 = vmatpush1.msra.mxu0 0.0
    %1236 = vmatprep.subr.mxu0 0.0
    %1237 = vmatpush1.msra.mxu0 0.0
    %1238 = vmatprep.subr.mxu0 0.0
    %1239 = vmatpush1.msra.mxu0 0.0
    %1240 = vmatprep.subr.mxu0 0.0
    %1241 = vmatpush1.msra.mxu0 0.0
    %1242 = vmatprep.subr.mxu0 0.0
    %1243 = vmatpush1.msra.mxu0 0.0
    %1244 = vmatprep.subr.mxu0 0.0
    %1245 = vmatpush1.msra.mxu0 0.0
    %1246 = vmatprep.mubr.f32.mxu0 0.0
    %1247 = vmatmul.mubr.f32.gmra.mrb[0].mxu0 %v223
    %v1248 = vpop.f32.mrb[0].mxu0
    %v1249 = vadd.f32 %v219, %v1248
    %v1250 = vpop.f32.mrb[0].mxu0
    %v1251 = vadd.f32 %v219, %v1250
    %1252 = vdwg.mxu0
    %v1253 = vstv %s970
    %v1254 = vmul.f32 %v1253, %v367
    %v1255 = vmul.f32 %v1253, %v368
    %v1256 = vmul.f32 %v1253, %v369
    %v1257 = vmul.f32 %v1253, %v370
    %v1258 = vadd.f32 %v1178, %v1254
    %v1259 = vadd.f32 %v1180, %v1255
    %v1260 = vadd.f32 %v1249, %v1256
    %v1261 = vadd.f32 %v1251, %v1257
    %v1262 = vtanh.pop %v1258
    %v1263 = vtanh.pop %v1259
    %v1264 = vtanh.pop %v1260
    %v1265 = vtanh.pop %v1261
    %v1266 = vadd.f32 %v676, %v966
    %v1267 = vadd.f32 %v677, %v967
    %v1268 = vadd.f32 %v678, %v968
    %v1269 = vadd.f32 %v679, %v969
    %v1270 = vmul.f32 %v1266, 2.0
    %v1271 = vmul.f32 %v1267, 2.0
    %v1272 = vmul.f32 %v1268, 2.0
    %v1273 = vmul.f32 %v1269, 2.0
    %v1274 = vadd.f32 %v380, %v1270
    %v1275 = vadd.f32 %v381, %v1271
    %v1276 = vadd.f32 %v382, %v1272
    %v1277 = vadd.f32 %v383, %v1273
    %v1278 = vadd.f32 %v1274, %v1262
    %v1279 = vadd.f32 %v1275, %v1263
    %v1280 = vadd.f32 %v1276, %v1264
    %v1281 = vadd.f32 %v1277, %v1265
    %v1282 = vmul.f32 %v1278, 0.020833334
    %v1283 = vmul.f32 %v1279, 0.020833334
    %v1284 = vmul.f32 %v1280, 0.020833334
    %v1285 = vmul.f32 %v1281, 0.020833334
    %v1286 = vadd.f32 %v30, %v1282
    %v1287 = vadd.f32 %v31, %v1283
    %v1288 = vadd.f32 %v32, %v1284
    %v1289 = vadd.f32 %v33, %v1285
  $region26: #{ode_block_forward.1} parent=0 // loop_footer
    %s29 = sadd.s32 1, %s25
  $region27: #{ode_block_forward.1} parent=0 // loop_footer_branch
    %24 = sbr.rel target = $region23
  $region28: #{ode_block_forward.1} parent=0 // loop_exit
    _
  %1290 = vst [vmem:[%s5] sm:$0xff] %v30
  %1291 = vst [vmem:[%s5 + $0x8] sm:$0xff] %v31
  %1292 = vst [vmem:[%s5 + $0x10] sm:$0xff] %v32
  %1293 = vst [vmem:[%s5 + $0x18] sm:$0xff] %v33
  // Predicated region
  $region29: #{ode_block_forward.1} parent=0 // pred_check
    _
  $region30: #{ode_block_forward.1} parent=0 // pred_check_branch
    %1295 = sbr.rel (0) target = $region32
  $region31: #{ode_block_forward.1} parent=0 // pred_region
    _
  $region32: #{ode_block_forward.1} parent=0 // pred_fallthru
    _
  // Predicated region
  $region33: #{ode_block_forward.1} parent=0 // pred_check
    _
  $region34: #{ode_block_forward.1} parent=0 // pred_check_branch
    %1297 = sbr.rel (0) target = $region36
  $region35: #{ode_block_forward.1} parent=0 // pred_region
    _
  $region36: #{ode_block_forward.1} parent=0 // pred_fallthru
    _

</llo_original>
